<compile_context>
chip_gen: v7x
topology: tpu7x:2x2x1
jax: 0.10.0
libtpu: 0.0.40
codegen_flags: <defaults>
</compile_context>

<pallas_src>
import jax
import jax.numpy as jnp
from jax.experimental import pallas as pl
from jax.experimental.pallas import tpu as pltpu

EPS = 1e-5
LANE = 128
SUBLANE = 8
STAT_LANES = 128


def _round_up(v, m):
    return ((v + m - 1) // m) * m


# --------------------------------------------------------------------------
# Phase 1: conv matmul (full-K, weight resident) + per-channel BN partial stats
# --------------------------------------------------------------------------
def _conv_stats_kernel(p_ref, w_ref, conv_ref, sum_ref, sq_ref):
    # p_ref:    [1, CKK_pad, TS]    bf16  im2col patch tile (spatial in lanes)
    # w_ref:    [OC_pad, CKK_pad]   bf16  conv weights, VMEM-resident
    # conv_ref: [1, OC_pad, TS]     bf16  raw conv output tile (channel-major)
    # sum_ref:  [1, OC_pad, 128]    f32   running per-channel sum   (acc over TS tiles)
    # sq_ref:   [1, OC_pad, 128]    f32   running per-channel sum of squares
    j = pl.program_id(1)

    @pl.when(j == 0)
    def _():
        sum_ref[...] = jnp.zeros_like(sum_ref)
        sq_ref[...] = jnp.zeros_like(sq_ref)

    # One long uninterrupted MXU contraction over the whole CKK axis.
    y = jnp.dot(w_ref[...], p_ref[0], preferred_element_type=jnp.float32)
    conv_ref[0] = y.astype(conv_ref.dtype)

    # Cross-lane (XLU) reductions for the batch statistics.  The (OC_pad, 1)
    # partials broadcast-add over the 128 stat lanes, so every lane carries the
    # same running total (host reads lane 0).  Padded spatial columns are zero
    # (no bias) and contribute nothing.
    sum_ref[0] += jnp.sum(y, axis=-1, keepdims=True)
    sq_ref[0] += jnp.sum(y * y, axis=-1, keepdims=True)


# --------------------------------------------------------------------------
# Phase 2: fused normalize (one FMA) + ReLU, channel-major tiles
# --------------------------------------------------------------------------
def _bn_relu_kernel(y_ref, scale_ref, shift_ref, o_ref):
    # y_ref:     [1, OC_pad, TS2]  bf16  conv intermediate (upcast on read)
    # scale_ref: [OC_pad, 1]       f32   gamma * rsqrt(var + eps)
    # shift_ref: [OC_pad, 1]       f32   beta - scale * mean
    # o_ref:     [1, OC_pad, TS2]  f32
    y = y_ref[0].astype(jnp.float32)
    o_ref[0] = jnp.maximum(y * scale_ref[...] + shift_ref[...], 0.0)


# --------------------------------------------------------------------------
# im2col (channel-major rows, spatial lanes), bf16 before expansion
# --------------------------------------------------------------------------
def _im2col_cmajor_bf16(x, k, stride, padding):
    """[N,C,H,W] f32 -> patches [N, C*K*K, OH*OW] bf16, row order (c, kh, kw).

    Casting to bf16 before the K^2 expansion halves the expanded copy XLA
    materializes; spatial stays in the minor (lane) dim so no NHWC transpose.
    # TODO(synk): fully fuse patch extraction into the Pallas kernel (kh*kw
    # reduction over strided NCHW slices DMA'd from pl.ANY) so the expanded
    # patch matrix never hits HBM.
    """
    n, c, h, w = x.shape
    oh = (h + 2 * padding - k) // stride + 1
    ow = (w + 2 * padding - k) // stride + 1
    xb = x.astype(jnp.bfloat16)
    xp = jnp.pad(xb, ((0, 0), (0, 0), (padding, padding), (padding, padding)))
    cols = []
    for kh in range(k):
        for kw in range(k):
            cols.append(xp[:, :, kh:kh + stride * oh:stride,
                           kw:kw + stride * ow:stride])
    p = jnp.stack(cols, axis=2)                 # [N, C, K*K, OH, OW]
    p = p.reshape(n, c * k * k, oh * ow)        # rows ordered (c, kh, kw)
    return p, oh, ow


# --------------------------------------------------------------------------
# Glue
# --------------------------------------------------------------------------
def down_forward(x, conv_w, conv_b, bn_gamma, bn_beta,
                 kernel_size=4, stride=2, padding=1):
    """x: [N,C,H,W] f32 -> [N,OC,OH,OW] f32.  Conv -> BN(train mode) -> ReLU."""
    # Train-mode BN subtracts the batch mean, which absorbs a constant
    # per-channel bias exactly (variance unchanged) -> fold the bias away.
    del conv_b

    n = x.shape[0]
    oc, c, k, _ = conv_w.shape
    patches, oh, ow = _im2col_cmajor_bf16(x, kernel_size, stride, padding)
    ckk = c * kernel_size * kernel_size
    ohw = oh * ow

    oc_pad = _round_up(oc, LANE)
    ckk_pad = _round_up(ckk, LANE)

    # ---- spatial (lane) tile selection, VMEM-budgeted ---------------------
    w_bytes = 2 * oc_pad * ckk_pad * 2            # resident weights, 2 bufs, bf16

    def _footprint(ts_):
        return (w_bytes
                + 2 * ckk_pad * ts_ * 2           # patch tile, 2 bufs, bf16
                + 2 * oc_pad * ts_ * 2            # conv tile,  2 bufs, bf16
                + 4 * oc_pad * STAT_LANES * 4)    # stats, 2 outs x 2 bufs, f32

    if ohw <= LANE:
        ts = _round_up(ohw, SUBLANE)              # full-dim (legal) small block
        ohw_pad = ts
    else:
        ts = LANE
        cap = _round_up(ohw, LANE)
        for cand in (2048, 1024, 512, 256, 128):
            if cand <= cap and _footprint(cand) <= (24 << 20):
                ts = cand
                break
        ohw_pad = _round_up(ohw, ts)
    num_st = ohw_pad // ts
    vmem_limit = int(min(max(_footprint(ts) + (4 << 20), 16 << 20), 56 << 20))

    # ---- padded bf16 MXU operands (jnp.pad, single pad op each) -----------
    p_pad = jnp.pad(patches, ((0, 0), (0, ckk_pad - ckk), (0, ohw_pad - ohw)))
    w_mat = conv_w.astype(jnp.bfloat16).reshape(oc, ckk)   # rows (c, kh, kw)
    w_pad = jnp.pad(w_mat, ((0, oc_pad - oc), (0, ckk_pad - ckk)))

    # ---- Phase 1: conv + partial BN stats ----------------------------------
    # TODO(synk): for very large C*K*K (weights no longer VMEM-resident) add a
    # K-reduction grid axis; typical Down-block sizes fit comfortably.
    conv_out, part_sum, part_sq = pl.pallas_call(
        _conv_stats_kernel,
        out_shape=(
            jax.ShapeDtypeStruct((n, oc_pad, ohw_pad), jnp.bfloat16),
            jax.ShapeDtypeStruct((n, oc_pad, STAT_LANES), jnp.float32),
            jax.ShapeDtypeStruct((n, oc_pad, STAT_LANES), jnp.float32),
        ),
        grid=(n, num_st),
        in_specs=[
            pl.BlockSpec((1, ckk_pad, ts), lambda b, j: (b, 0, j)),
            pl.BlockSpec((oc_pad, ckk_pad), lambda b, j: (0, 0)),   # resident W
        ],
        out_specs=(
            pl.BlockSpec((1, oc_pad, ts), lambda b, j: (b, 0, j)),
            pl.BlockSpec((1, oc_pad, STAT_LANES), lambda b, j: (b, 0, 0)),
            pl.BlockSpec((1, oc_pad, STAT_LANES), lambda b, j: (b, 0, 0)),
        ),
        compiler_params=pltpu.CompilerParams(
            dimension_semantics=("parallel", "arbitrary"),
            vmem_limit_bytes=vmem_limit),
    )(p_pad, w_pad)

    # ---- tiny per-channel stat finalize in plain JAX -----------------------
    # Single-pass E[y^2]-mean^2 in f32 (clamped); fine for activation-scale
    # data.  Padded rows/cols contributed exactly zero, so divide by true M.
    m_true = float(n * ohw)
    ch_sum = jnp.sum(part_sum[:, :, 0], axis=0)
    ch_sq = jnp.sum(part_sq[:, :, 0], axis=0)
    mean = ch_sum / m_true
    var = jnp.maximum(ch_sq / m_true - mean * mean, 0.0)

    gamma_pad = jnp.pad(bn_gamma.astype(jnp.float32), (0, oc_pad - oc))
    beta_pad = jnp.pad(bn_beta.astype(jnp.float32), (0, oc_pad - oc))
    scale_v = gamma_pad * jax.lax.rsqrt(var + EPS)
    shift_v = beta_pad - scale_v * mean
    scale = scale_v.reshape(oc_pad, 1)
    shift = shift_v.reshape(oc_pad, 1)

    # ---- Phase 2: normalize + ReLU (mem-bound, bigger tiles) ---------------
    if oc_pad * ohw_pad * (2 + 4) * 2 <= (12 << 20):
        ts2 = ohw_pad
    else:
        ts2 = ts
    num_st2 = ohw_pad // ts2

    out_pad = pl.pallas_call(
        _bn_relu_kernel,
        out_shape=jax.ShapeDtypeStruct((n, oc_pad, ohw_pad), jnp.float32),
        grid=(n, num_st2),
        in_specs=[
            pl.BlockSpec((1, oc_pad, ts2), lambda b, j: (b, 0, j)),
            pl.BlockSpec((oc_pad, 1), lambda b, j: (0, 0)),
            pl.BlockSpec((oc_pad, 1), lambda b, j: (0, 0)),
        ],
        out_specs=pl.BlockSpec((1, oc_pad, ts2), lambda b, j: (b, 0, j)),
        compiler_params=pltpu.CompilerParams(
            dimension_semantics=("parallel", "parallel")),
    )(conv_out, scale, shift)

    # Output is already channel-major: no NCHW transpose.  The slice is a no-op
    # whenever OC and OH*OW are already lane/padding aligned.
    out = out_pad[:, :oc, :ohw].reshape(n, oc, oh, ow)
    return out


# --------------------------------------------------------------------------
# Pure-JAX references for validation
# --------------------------------------------------------------------------
def _reference(x, conv_w, conv_b, bn_gamma, bn_beta,
               stride=2, padding=1, conv_dtype=jnp.float32):
    y = jax.lax.conv_general_dilated(
        x.astype(conv_dtype), conv_w.astype(conv_dtype),
        window_strides=(stride, stride),
        padding=[(padding, padding), (padding, padding)],
        dimension_numbers=("NCHW", "OIHW", "NCHW"),
        preferred_element_type=jnp.float32)
    y = y + conv_b.reshape(1, -1, 1, 1)
    mean = jnp.mean(y, axis=(0, 2, 3), keepdims=True)
    var = jnp.mean((y - mean) ** 2, axis=(0, 2, 3), keepdims=True)
    y = (y - mean) * jax.lax.rsqrt(var + EPS)
    y = bn_gamma.reshape(1, -1, 1, 1) * y + bn_beta.reshape(1, -1, 1, 1)
    return jnp.maximum(y, 0.0)


if __name__ == "__main__":
    key = jax.random.PRNGKey(0)
    k_x, k_w, k_b, k_g, k_be = jax.random.split(key, 5)

    N, C, H, W = 2, 4, 16, 16
    OC, K = 8, 4

    x = jax.random.normal(k_x, (N, C, H, W), dtype=jnp.float32)

    fan_in = C * K * K
    bound = 1.0 / (fan_in ** 0.5)
    conv_w = jax.random.uniform(k_w, (OC, C, K, K), jnp.float32, -bound, bound)
    conv_b = jax.random.uniform(k_b, (OC,), jnp.float32, -bound, bound)
    bn_gamma = 1.0 + 0.1 * jax.random.normal(k_g, (OC,), jnp.float32)
    bn_beta = 0.1 * jax.random.normal(k_be, (OC,), jnp.float32)

    down = jax.jit(down_forward)
    out = jax.block_until_ready(down(x, conv_w, conv_b, bn_gamma, bn_beta))
    assert out.shape == (N, OC, H // 2, W // 2), out.shape

    # Check vs a reference using the same bf16 conv operands (f32 accum).
    # Tolerance accounts for the bf16 conv intermediate between the two phases.
    ref_bf16 = _reference(x, conv_w, conv_b, bn_gamma, bn_beta,
                          conv_dtype=jnp.bfloat16)
    assert jnp.allclose(out, ref_bf16, atol=2e-2, rtol=2e-2), \
        "mismatch vs bf16-operand reference"

    # Loose sanity check vs the full-f32 reference (bf16 MXU rounding only).
    ref_f32 = _reference(x, conv_w, conv_b, bn_gamma, bn_beta,
                         conv_dtype=jnp.float32)
    assert jnp.allclose(out, ref_f32, atol=5e-2, rtol=5e-2), \
        "mismatch vs f32 reference"

    print("KERNEL_OK")
</pallas_src>

<mosaic_0001>
module attributes {stable_mosaic.version = 11 : i64} {
  func.func @_conv_stats_kernel(%arg0: i32, %arg1: i32, %arg2: memref<1x128x64xbf16, #tpu.memory_space<vmem>>, %arg3: memref<128x128xbf16, #tpu.memory_space<vmem>>, %arg4: memref<1x128x64xbf16, #tpu.memory_space<vmem>>, %arg5: memref<1x128x128xf32, #tpu.memory_space<vmem>>, %arg6: memref<1x128x128xf32, #tpu.memory_space<vmem>>) attributes {dimension_semantics = [#tpu.dimension_semantics<parallel>, #tpu.dimension_semantics<arbitrary>], iteration_bounds = array<i64: 2, 1>, scalar_prefetch = 0 : i64, scratch_operands = 0 : i64, tpu.core_type = #tpu.core_type<tc>, window_params = [{transform_indices = @transform_0, window_bounds = array<i64: 1, 128, 64>}, {pipeline_mode = #tpu.pipeline_mode<synchronous>, transform_indices = @transform_1, window_bounds = array<i64: 128, 128>}, {transform_indices = @transform_2, window_bounds = array<i64: 1, 128, 64>}, {transform_indices = @transform_3, window_bounds = array<i64: 1, 128, 128>}, {transform_indices = @transform_4, window_bounds = array<i64: 1, 128, 128>}]} {
    %c0_i32 = arith.constant 0 : i32
    %0 = arith.cmpi eq, %arg1, %c0_i32 : i32
    %1 = arith.extui %0 : i1 to i32
    %c0_i32_0 = arith.constant 0 : i32
    %2 = arith.cmpi ne, %1, %c0_i32_0 : i32
    scf.if %2 {
      %cst_22 = arith.constant 0.000000e+00 : f32
      %30 = vector.broadcast %cst_22 : f32 to vector<1x128x128xf32>
      %c0_23 = arith.constant 0 : index
      %c0_24 = arith.constant 0 : index
      %c0_25 = arith.constant 0 : index
      %31 = vector.load %arg5[%c0_23, %c0_24, %c0_25] : memref<1x128x128xf32, #tpu.memory_space<vmem>>, vector<1x128x128xf32>
      tpu.vector_store %arg5[%c0_23, %c0_24, %c0_25], %30 {strides = array<i32>} : memref<1x128x128xf32, #tpu.memory_space<vmem>>, vector<1x128x128xf32>,
      %cst_26 = arith.constant 0.000000e+00 : f32
      %32 = vector.broadcast %cst_26 : f32 to vector<1x128x128xf32>
      %c0_27 = arith.constant 0 : index
      %c0_28 = arith.constant 0 : index
      %c0_29 = arith.constant 0 : index
      %33 = vector.load %arg6[%c0_27, %c0_28, %c0_29] : memref<1x128x128xf32, #tpu.memory_space<vmem>>, vector<1x128x128xf32>
      tpu.vector_store %arg6[%c0_27, %c0_28, %c0_29], %32 {strides = array<i32>} : memref<1x128x128xf32, #tpu.memory_space<vmem>>, vector<1x128x128xf32>,
    } else {
    }
    %c0 = arith.constant 0 : index
    %c0_1 = arith.constant 0 : index
    %3 = vector.load %arg3[%c0, %c0_1] : memref<128x128xbf16, #tpu.memory_space<vmem>>, vector<128x128xbf16>
    %c0_2 = arith.constant 0 : index
    %c0_3 = arith.constant 0 : index
    %c0_4 = arith.constant 0 : index
    %4 = vector.load %arg2[%c0_2, %c0_3, %c0_4] : memref<1x128x64xbf16, #tpu.memory_space<vmem>>, vector<1x128x64xbf16>
    %5 = vector.shape_cast %4 : vector<1x128x64xbf16> to vector<128x64xbf16>
    %cst = arith.constant dense<0.000000e+00> : vector<128x64xf32>
    %6 = tpu.matmul %3, %5, %cst {dimension_numbers = #tpu.dot_dimension_numbers<[1], [0], [0], [1], [0, 0, 1, 1], [], []>} : vector<128x128xbf16>, vector<128x64xbf16>, vector<128x64xf32> -> vector<128x64xf32>
    %7 = arith.truncf %6 : vector<128x64xf32> to vector<128x64xbf16>
    %c0_5 = arith.constant 0 : index
    %c0_6 = arith.constant 0 : index
    %c0_7 = arith.constant 0 : index
    %8 = vector.load %arg4[%c0_5, %c0_6, %c0_7] : memref<1x128x64xbf16, #tpu.memory_space<vmem>>, vector<1x128x64xbf16>
    %9 = vector.shape_cast %8 : vector<1x128x64xbf16> to vector<128x64xbf16>
    %10 = vector.shape_cast %7 : vector<128x64xbf16> to vector<1x128x64xbf16>
    tpu.vector_store %arg4[%c0_5, %c0_6, %c0_7], %10 {strides = array<i32>} : memref<1x128x64xbf16, #tpu.memory_space<vmem>>, vector<1x128x64xbf16>,
    %c0_8 = arith.constant 0 : index
    %c0_9 = arith.constant 0 : index
    %c0_10 = arith.constant 0 : index
    %11 = vector.load %arg5[%c0_8, %c0_9, %c0_10] : memref<1x128x128xf32, #tpu.memory_space<vmem>>, vector<1x128x128xf32>
    %12 = vector.shape_cast %11 : vector<1x128x128xf32> to vector<128x128xf32>
    %cst_11 = arith.constant dense<0.000000e+00> : vector<128xf32>
    %13 = vector.multi_reduction <add>, %6, %cst_11 [1] : vector<128x64xf32> to vector<128xf32>
    %14 = vector.shape_cast %13 : vector<128xf32> to vector<128x1xf32>
    %15 = vector.broadcast %14 : vector<128x1xf32> to vector<128x128xf32>
    %16 = arith.addf %12, %15 : vector<128x128xf32>
    %c0_12 = arith.constant 0 : index
    %c0_13 = arith.constant 0 : index
    %c0_14 = arith.constant 0 : index
    %17 = vector.load %arg5[%c0_12, %c0_13, %c0_14] : memref<1x128x128xf32, #tpu.memory_space<vmem>>, vector<1x128x128xf32>
    %18 = vector.shape_cast %17 : vector<1x128x128xf32> to vector<128x128xf32>
    %19 = vector.shape_cast %16 : vector<128x128xf32> to vector<1x128x128xf32>
    tpu.vector_store %arg5[%c0_12, %c0_13, %c0_14], %19 {strides = array<i32>} : memref<1x128x128xf32, #tpu.memory_space<vmem>>, vector<1x128x128xf32>,
    %c0_15 = arith.constant 0 : index
    %c0_16 = arith.constant 0 : index
    %c0_17 = arith.constant 0 : index
    %20 = vector.load %arg6[%c0_15, %c0_16, %c0_17] : memref<1x128x128xf32, #tpu.memory_space<vmem>>, vector<1x128x128xf32>
    %21 = vector.shape_cast %20 : vector<1x128x128xf32> to vector<128x128xf32>
    %22 = arith.mulf %6, %6 : vector<128x64xf32>
    %cst_18 = arith.constant dense<0.000000e+00> : vector<128xf32>
    %23 = vector.multi_reduction <add>, %22, %cst_18 [1] : vector<128x64xf32> to vector<128xf32>
    %24 = vector.shape_cast %23 : vector<128xf32> to vector<128x1xf32>
    %25 = vector.broadcast %24 : vector<128x1xf32> to vector<128x128xf32>
    %26 = arith.addf %21, %25 : vector<128x128xf32>
    %c0_19 = arith.constant 0 : index
    %c0_20 = arith.constant 0 : index
    %c0_21 = arith.constant 0 : index
    %27 = vector.load %arg6[%c0_19, %c0_20, %c0_21] : memref<1x128x128xf32, #tpu.memory_space<vmem>>, vector<1x128x128xf32>
    %28 = vector.shape_cast %27 : vector<1x128x128xf32> to vector<128x128xf32>
    %29 = vector.shape_cast %26 : vector<128x128xf32> to vector<1x128x128xf32>
    tpu.vector_store %arg6[%c0_19, %c0_20, %c0_21], %29 {strides = array<i32>} : memref<1x128x128xf32, #tpu.memory_space<vmem>>, vector<1x128x128xf32>,
    return
  }
  func.func @transform_0(%arg0: i32, %arg1: i32) -> (i32, i32, i32) {
    %c0_i32 = arith.constant 0 : i32
    %c0_i32_0 = arith.constant 0 : i32
    return %arg0, %c0_i32, %arg1 : i32, i32, i32
  }
  func.func @transform_1(%arg0: i32, %arg1: i32) -> (i32, i32) {
    %c0_i32 = arith.constant 0 : i32
    %c0_i32_0 = arith.constant 0 : i32
    %c0_i32_1 = arith.constant 0 : i32
    return %c0_i32, %c0_i32_0 : i32, i32
  }
  func.func @transform_2(%arg0: i32, %arg1: i32) -> (i32, i32, i32) {
    %c0_i32 = arith.constant 0 : i32
    %c0_i32_0 = arith.constant 0 : i32
    return %arg0, %c0_i32, %arg1 : i32, i32, i32
  }
  func.func @transform_3(%arg0: i32, %arg1: i32) -> (i32, i32, i32) {
    %c0_i32 = arith.constant 0 : i32
    %c0_i32_0 = arith.constant 0 : i32
    %c0_i32_1 = arith.constant 0 : i32
    return %arg0, %c0_i32, %c0_i32_0 : i32, i32, i32
  }
  func.func @transform_4(%arg0: i32, %arg1: i32) -> (i32, i32, i32) {
    %c0_i32 = arith.constant 0 : i32
    %c0_i32_0 = arith.constant 0 : i32
    %c0_i32_1 = arith.constant 0 : i32
    return %arg0, %c0_i32, %c0_i32_0 : i32, i32, i32
  }
}

module attributes {stable_mosaic.version = 11 : i64} {
  func.func @_bn_relu_kernel(%arg0: i32, %arg1: i32, %arg2: memref<1x128x64xbf16, #tpu.memory_space<vmem>>, %arg3: memref<128x1xf32, #tpu.memory_space<vmem>>, %arg4: memref<128x1xf32, #tpu.memory_space<vmem>>, %arg5: memref<1x128x64xf32, #tpu.memory_space<vmem>>) attributes {dimension_semantics = [#tpu.dimension_semantics<parallel>, #tpu.dimension_semantics<parallel>], iteration_bounds = array<i64: 2, 1>, scalar_prefetch = 0 : i64, scratch_operands = 0 : i64, tpu.core_type = #tpu.core_type<tc>, window_params = [{transform_indices = @transform_0, window_bounds = array<i64: 1, 128, 64>}, {pipeline_mode = #tpu.pipeline_mode<synchronous>, transform_indices = @transform_1, window_bounds = array<i64: 128, 1>}, {pipeline_mode = #tpu.pipeline_mode<synchronous>, transform_indices = @transform_2, window_bounds = array<i64: 128, 1>}, {transform_indices = @transform_3, window_bounds = array<i64: 1, 128, 64>}]} {
    %c0 = arith.constant 0 : index
    %c0_0 = arith.constant 0 : index
    %c0_1 = arith.constant 0 : index
    %0 = vector.load %arg2[%c0, %c0_0, %c0_1] : memref<1x128x64xbf16, #tpu.memory_space<vmem>>, vector<1x128x64xbf16>
    %1 = vector.shape_cast %0 : vector<1x128x64xbf16> to vector<128x64xbf16>
    %2 = arith.extf %1 : vector<128x64xbf16> to vector<128x64xf32>
    %c0_2 = arith.constant 0 : index
    %c0_3 = arith.constant 0 : index
    %3 = vector.load %arg3[%c0_2, %c0_3] : memref<128x1xf32, #tpu.memory_space<vmem>>, vector<128x1xf32>
    %4 = vector.broadcast %3 : vector<128x1xf32> to vector<128x64xf32>
    %5 = arith.mulf %2, %4 : vector<128x64xf32>
    %c0_4 = arith.constant 0 : index
    %c0_5 = arith.constant 0 : index
    %6 = vector.load %arg4[%c0_4, %c0_5] : memref<128x1xf32, #tpu.memory_space<vmem>>, vector<128x1xf32>
    %7 = vector.broadcast %6 : vector<128x1xf32> to vector<128x64xf32>
    %8 = arith.addf %5, %7 : vector<128x64xf32>
    %cst = arith.constant 0.000000e+00 : f32
    %9 = vector.broadcast %cst : f32 to vector<128x64xf32>
    %10 = arith.maximumf %8, %9 : vector<128x64xf32>
    %c0_6 = arith.constant 0 : index
    %c0_7 = arith.constant 0 : index
    %c0_8 = arith.constant 0 : index
    %11 = vector.load %arg5[%c0_6, %c0_7, %c0_8] : memref<1x128x64xf32, #tpu.memory_space<vmem>>, vector<1x128x64xf32>
    %12 = vector.shape_cast %11 : vector<1x128x64xf32> to vector<128x64xf32>
    %13 = vector.shape_cast %10 : vector<128x64xf32> to vector<1x128x64xf32>
    tpu.vector_store %arg5[%c0_6, %c0_7, %c0_8], %13 {strides = array<i32>} : memref<1x128x64xf32, #tpu.memory_space<vmem>>, vector<1x128x64xf32>,
    return
  }
  func.func @transform_0(%arg0: i32, %arg1: i32) -> (i32, i32, i32) {
    %c0_i32 = arith.constant 0 : i32
    %c0_i32_0 = arith.constant 0 : i32
    return %arg0, %c0_i32, %arg1 : i32, i32, i32
  }
  func.func @transform_1(%arg0: i32, %arg1: i32) -> (i32, i32) {
    %c0_i32 = arith.constant 0 : i32
    %c0_i32_0 = arith.constant 0 : i32
    %c0_i32_1 = arith.constant 0 : i32
    return %c0_i32, %c0_i32_0 : i32, i32
  }
  func.func @transform_2(%arg0: i32, %arg1: i32) -> (i32, i32) {
    %c0_i32 = arith.constant 0 : i32
    %c0_i32_0 = arith.constant 0 : i32
    %c0_i32_1 = arith.constant 0 : i32
    return %c0_i32, %c0_i32_0 : i32, i32
  }
  func.func @transform_3(%arg0: i32, %arg1: i32) -> (i32, i32, i32) {
    %c0_i32 = arith.constant 0 : i32
    %c0_i32_0 = arith.constant 0 : i32
    return %arg0, %c0_i32, %arg1 : i32, i32, i32
  }
}

</mosaic_0001>

<llo_original>
// kernel: down_forward.3
$region0: #{down_forward.3}
  #allocation0 [shape = 'u32[]', space=smem, size = 0x4, offset = 0x4, fixed_abs, tag = 'smem constant byte address 0x4 - core index']
  #allocation1 [shape = 'u32[144,128]{1,0:T(1,128)}', space=vmem, size = 0x12000, scoped, tag = 'internal scratch']
  %s0 = inlined_call_operand.vmem [shape: bf16[2,128,64], index: 0, kind: input, shape index: {}]
  %s1 = inlined_call_operand.vmem [shape: f32[128,1], index: 1, kind: input, shape index: {}]
  %s2 = inlined_call_operand.vmem [shape: f32[128,1], index: 2, kind: input, shape index: {}]
  %s3 = inlined_call_operand.vmem [shape: f32[2,128,64], index: 3, kind: output, shape index: {}]
  %s4 = sld [smem:[#allocation0]]
  $region45: #{down_forward.3} parent=0
    _
  %s6 = ssub.s32 1, %s4
  %s7 = scalar_select 0, %s6, %s4
  loop: start=0, step=1, limit=4
  $region2: #{down_forward.3} parent=0 // loop_pre_header
    _
  $region3: #{down_forward.3} parent=0 // loop_header
    %s9 = sphi 0, %s13
    %p10 = scmp.ge.s32.totalorder %s9, 4
    %s16 = sphi 0, %s28
    %s17 = sphi 0, %s24
    %s18 = sphi 0, %s16
    %s19 = sphi 0, %s17
    %s20 = sphi 0, %s18
    %s21 = sphi 0, %s19
    %s33 = sphi 0, %s35
    %s36 = sphi 0, %s33
    %s37 = sphi 0, %s36
    %s53 = sphi 0, %s37
    %s57 = sphi 0, %s57
    %s59 = sphi 0, %s57
    %s60 = sphi 0, %s59
    %s74 = sphi 0, %s60
    %s78 = sphi 0, %s78
    %s80 = sphi 0, %s78
    %s81 = sphi 0, %s80
    %s95 = sphi 0, %s81
    %s103 = sphi 0, %s105
    %s106 = sphi 0, %s103
    %s107 = sphi 0, %s106
    %s123 = sphi 0, %s107
  $region4: #{down_forward.3} parent=0 // loop_header_branch
    %12 = sbr.rel (%p10) target = $region8
  $region5: #{down_forward.3} parent=0 // loop_body
    %s14 = ssub.s32 %s9, 1
    %s15 = ssub.s32 %s9, 2
    %s22 = sadd.s32 1, %s17
    %p23 = scmp.ge.s32.totalorder %s22, 1
    %s24 = scalar_select %p23, 0, %s22
    %s25 = sadd.s32 1, %s16
    %s26 = scalar_select %p23, %s25, %s16
    %p27 = scmp.ge.s32.totalorder %s26, 2
    %s28 = scalar_select %p27, 0, %s26
    %s29 = ssub.s32 %s16, %s28
    %s30 = ssub.s32 %s17, %s24
    %s31 = sor.u32 %s29, %s30
    %p32 = scmp.eq.s32.totalorder %s31, 0
    %s34 = sadd.s32 %s33, 1
    %s35 = scalar_select %p32, %s33, %s34
    %p38 = pneg %p32
    %p39 = scmp.eq.s32.totalorder %s9, 1
    %p40 = por %p38, %p39
    %p41 = scmp.ne.s32.totalorder %s33, %s36
    %p42 = scmp.eq.s32.totalorder %s9, 0
    %p43 = por %p41, %p42
    %p44 = scmp.ne.s32.totalorder %s33, %s36
    %p45 = scmp.eq.s32.totalorder %s14, 1
    %p46 = por %p44, %p45
    %p47 = scmp.ne.s32.totalorder %s36, %s37
    %p48 = scmp.eq.s32.totalorder %s14, 0
    %p49 = por %p47, %p48
    %p50 = scmp.ne.s32.totalorder %s36, %s37
    %p51 = scmp.eq.s32.totalorder %s15, 1
    %p52 = por %p50, %p51
    %p54 = scmp.ne.s32.totalorder %s37, %s53
    %p55 = scmp.eq.s32.totalorder %s15, 0
    %p56 = por %p54, %p55
    %s58 = sadd.s32 %s57, 1
    %p61 = scmp.eq.s32.totalorder %s9, 1
    %p62 = scmp.ne.s32.totalorder %s57, %s59
    %p63 = scmp.eq.s32.totalorder %s9, 0
    %p64 = por %p62, %p63
    %p65 = scmp.ne.s32.totalorder %s57, %s59
    %p66 = scmp.eq.s32.totalorder %s14, 1
    %p67 = por %p65, %p66
    %p68 = scmp.ne.s32.totalorder %s59, %s60
    %p69 = scmp.eq.s32.totalorder %s14, 0
    %p70 = por %p68, %p69
    %p71 = scmp.ne.s32.totalorder %s59, %s60
    %p72 = scmp.eq.s32.totalorder %s15, 1
    %p73 = por %p71, %p72
    %p75 = scmp.ne.s32.totalorder %s60, %s74
    %p76 = scmp.eq.s32.totalorder %s15, 0
    %p77 = por %p75, %p76
    %s79 = sadd.s32 %s78, 1
    %p82 = scmp.eq.s32.totalorder %s9, 1
    %p83 = scmp.ne.s32.totalorder %s78, %s80
    %p84 = scmp.eq.s32.totalorder %s9, 0
    %p85 = por %p83, %p84
    %p86 = scmp.ne.s32.totalorder %s78, %s80
    %p87 = scmp.eq.s32.totalorder %s14, 1
    %p88 = por %p86, %p87
    %p89 = scmp.ne.s32.totalorder %s80, %s81
    %p90 = scmp.eq.s32.totalorder %s14, 0
    %p91 = por %p89, %p90
    %p92 = scmp.ne.s32.totalorder %s80, %s81
    %p93 = scmp.eq.s32.totalorder %s15, 1
    %p94 = por %p92, %p93
    %p96 = scmp.ne.s32.totalorder %s81, %s95
    %p97 = scmp.eq.s32.totalorder %s15, 0
    %p98 = por %p96, %p97
    %s99 = ssub.s32 %s16, %s28
    %s100 = ssub.s32 %s17, %s24
    %s101 = sor.u32 %s99, %s100
    %p102 = scmp.eq.s32.totalorder %s101, 0
    %s104 = sadd.s32 %s103, 1
    %s105 = scalar_select %p102, %s103, %s104
    %p108 = pneg %p102
    %p109 = scmp.eq.s32.totalorder %s9, 1
    %p110 = por %p108, %p109
    %p111 = scmp.ne.s32.totalorder %s103, %s106
    %p112 = scmp.eq.s32.totalorder %s9, 0
    %p113 = por %p111, %p112
    %p114 = scmp.ne.s32.totalorder %s103, %s106
    %p115 = scmp.eq.s32.totalorder %s14, 1
    %p116 = por %p114, %p115
    %p117 = scmp.ne.s32.totalorder %s106, %s107
    %p118 = scmp.eq.s32.totalorder %s14, 0
    %p119 = por %p117, %p118
    %p120 = scmp.ne.s32.totalorder %s106, %s107
    %p121 = scmp.eq.s32.totalorder %s15, 1
    %p122 = por %p120, %p121
    %p124 = scmp.ne.s32.totalorder %s107, %s123
    %p125 = scmp.eq.s32.totalorder %s15, 0
    %p126 = por %p124, %p125
    %p127 = scmp.le.s32.totalorder 1, %s9
    %p128 = scmp.lt.s32.totalorder %s9, 3
    %p129 = pnand %p127, %p128
    %p130 = pneg %p129
    // Predicated region
    $region9: #{down_forward.3} parent=5 // pred_check
      _
    $region10: #{down_forward.3} parent=5 // pred_check_branch
      %132 = sbr.rel (%p129) target = $region12
    $region11: #{down_forward.3} parent=5 // pred_region
      %s133 = ssub.s32 %s9, 1
      // Predicated region
      $region13: #{down_forward.3} parent=11 // pred_check
        %p134 = pneg %p70
      $region14: #{down_forward.3} parent=11 // pred_check_branch
        %136 = sbr.rel (%p134) target = $region16
      $region15: #{down_forward.3} parent=11 // pred_region
        _
      $region16: #{down_forward.3} parent=11 // pred_fallthru
        _
      // Predicated region
      $region17: #{down_forward.3} parent=11 // pred_check
        %p137 = pneg %p91
      $region18: #{down_forward.3} parent=11 // pred_check_branch
        %139 = sbr.rel (%p137) target = $region20
      $region19: #{down_forward.3} parent=11 // pred_region
        _
      $region20: #{down_forward.3} parent=11 // pred_fallthru
        _
    $region12: #{down_forward.3} parent=5 // pred_fallthru
      _
    %p140 = scmp.lt.s32.totalorder %s9, 2
    // Predicated region
    $region21: #{down_forward.3} parent=5 // pred_check
      %p141 = pneg %p140
    $region22: #{down_forward.3} parent=5 // pred_check_branch
      %143 = sbr.rel (%p141) target = $region24
    $region23: #{down_forward.3} parent=5 // pred_region
      // Predicated region
      $region25: #{down_forward.3} parent=23 // pred_check
        %p144 = pneg %p43
      $region26: #{down_forward.3} parent=23 // pred_check_branch
        %146 = sbr.rel (%p144) target = $region28
      $region27: #{down_forward.3} parent=23 // pred_region
        %p147 = scmp.lt.s32.totalorder %s16, 1
        %s148 = scalar_select %p147, %s16, 1
        %p149 = scmp.lt.s32.totalorder %s17, 0
        %s150 = scalar_select %p149, %s17, 0
        %s151 = smul.addr %s148, 16
        %s152 = sadd.s32 %s150, %s151
        %s153 = smul.addr %s152, 4
        %s154 = scalar_lea.vmem %s0, %s153
      $region28: #{down_forward.3} parent=23 // pred_fallthru
        _
    $region24: #{down_forward.3} parent=5 // pred_fallthru
      _
    %p155 = scmp.le.s32.totalorder 1, %s9
    %p156 = scmp.lt.s32.totalorder %s9, 3
    %p157 = pnand %p155, %p156
    %p158 = pneg %p157
    // Predicated region
    $region29: #{down_forward.3} parent=5 // pred_check
      _
    $region30: #{down_forward.3} parent=5 // pred_check_branch
      %160 = sbr.rel (%p157) target = $region32
    $region31: #{down_forward.3} parent=5 // pred_region
      %s161 = ssub.s32 %s9, 1
      %p162 = scmp.lt.s32.totalorder %s18, 1
      %s163 = scalar_select %p162, %s18, 1
      %p164 = scmp.lt.s32.totalorder %s19, 0
      %s165 = scalar_select %p164, %s19, 0
      %s166 = smul.addr %s163, 16
      %s167 = sadd.s32 %s165, %s166
      %s168 = smul.addr %s167, 4
      %s169 = scalar_lea.vmem %s0, %s168
      %p170 = pneg %p49
      %p171 = pneg %p46
      %p172 = pneg %p70
      %p173 = pneg %p67
      %p174 = pneg %p91
      %p175 = pneg %p88
      %p176 = pneg %p119
      %p177 = pneg %p116
      %p178 = scmp.lt.s32.totalorder %s18, 1
      %s179 = scalar_select %p178, %s18, 1
      %p180 = scmp.lt.s32.totalorder %s19, 0
      %s181 = scalar_select %p180, %s19, 0
      %s182 = smul.addr %s179, 16
      %s183 = sadd.s32 %s181, %s182
      %s184 = smul.addr %s183, 8
      %s185 = scalar_lea.vmem %s3, %s184
      %p186 = scmp.lt.s32.totalorder %s18, 1
      %s187 = scalar_select %p186, %s18, 1
      %p188 = scmp.lt.s32.totalorder %s19, 0
      %s189 = scalar_select %p188, %s19, 0
      %s190 = smul.addr %s187, 16
      %s191 = sadd.s32 %s189, %s190
      %s192 = smul.addr %s191, 4
      %s193 = scalar_lea.vmem %s0, %s192
      %p194 = scmp.lt.s32.totalorder %s18, 1
      %s195 = scalar_select %p194, %s18, 1
      %p196 = scmp.lt.s32.totalorder %s19, 0
      %s197 = scalar_select %p196, %s19, 0
      %s198 = smul.addr %s195, 16
      %s199 = sadd.s32 %s197, %s198
      %s200 = smul.addr %s199, 8
      %s201 = scalar_lea.vmem %s3, %s200
      %v202 = vld [vmem:[%s193] sm:$0xf]
      %v203 = vld [vmem:[%s193 + $0x4] sm:$0xf]
      %v204 = vld [vmem:[%s193 + $0x8] sm:$0xf]
      %v205 = vld [vmem:[%s193 + $0xc] sm:$0xf]
      %v206 = vld [vmem:[%s193 + $0x10] sm:$0xf]
      %v207 = vld [vmem:[%s193 + $0x14] sm:$0xf]
      %v208 = vld [vmem:[%s193 + $0x18] sm:$0xf]
      %v209 = vld [vmem:[%s193 + $0x1c] sm:$0xf]
      %v210 = vld [vmem:[%s193 + $0x20] sm:$0xf]
      %v211 = vld [vmem:[%s193 + $0x24] sm:$0xf]
      %v212 = vld [vmem:[%s193 + $0x28] sm:$0xf]
      %v213 = vld [vmem:[%s193 + $0x2c] sm:$0xf]
      %v214 = vld [vmem:[%s193 + $0x30] sm:$0xf]
      %v215 = vld [vmem:[%s193 + $0x34] sm:$0xf]
      %v216 = vld [vmem:[%s193 + $0x38] sm:$0xf]
      %v217 = vld [vmem:[%s193 + $0x3c] sm:$0xf]
      %v218 = vunpack.c.l.bf16 %v202
      %v219 = vunpack.c.l.bf16 %v203
      %v220 = vunpack.c.l.bf16 %v204
      %v221 = vunpack.c.l.bf16 %v205
      %v222 = vunpack.c.l.bf16 %v206
      %v223 = vunpack.c.l.bf16 %v207
      %v224 = vunpack.c.l.bf16 %v208
      %v225 = vunpack.c.l.bf16 %v209
      %v226 = vunpack.c.l.bf16 %v210
      %v227 = vunpack.c.l.bf16 %v211
      %v228 = vunpack.c.l.bf16 %v212
      %v229 = vunpack.c.l.bf16 %v213
      %v230 = vunpack.c.l.bf16 %v214
      %v231 = vunpack.c.l.bf16 %v215
      %v232 = vunpack.c.l.bf16 %v216
      %v233 = vunpack.c.l.bf16 %v217
      %v234 = vld [vmem:[%s1] sm:$0xff]
      %v235 = vld [vmem:[%s1 + $0x8] sm:$0xff]
      %v236 = vld [vmem:[%s1 + $0x10] sm:$0xff]
      %v237 = vld [vmem:[%s1 + $0x18] sm:$0xff]
      %v238 = vld [vmem:[%s1 + $0x20] sm:$0xff]
      %v239 = vld [vmem:[%s1 + $0x28] sm:$0xff]
      %v240 = vld [vmem:[%s1 + $0x30] sm:$0xff]
      %v241 = vld [vmem:[%s1 + $0x38] sm:$0xff]
      %v242 = vld [vmem:[%s1 + $0x40] sm:$0xff]
      %v243 = vld [vmem:[%s1 + $0x48] sm:$0xff]
      %v244 = vld [vmem:[%s1 + $0x50] sm:$0xff]
      %v245 = vld [vmem:[%s1 + $0x58] sm:$0xff]
      %v246 = vld [vmem:[%s1 + $0x60] sm:$0xff]
      %v247 = vld [vmem:[%s1 + $0x68] sm:$0xff]
      %v248 = vld [vmem:[%s1 + $0x70] sm:$0xff]
      %v249 = vld [vmem:[%s1 + $0x78] sm:$0xff]
      %251 = vset.pattern.permute.xlu0 0
      %252 = vperm.xlu0 %251, %v234
      %v253 = vpop.permute.xlu0 %252
      %256 = vset.pattern.permute.xlu0 0
      %257 = vperm.xlu0 %256, %v235
      %v258 = vpop.permute.xlu0 %257
      %261 = vset.pattern.permute.xlu0 0
      %262 = vperm.xlu0 %261, %v236
      %v263 = vpop.permute.xlu0 %262
      %266 = vset.pattern.permute.xlu0 0
      %267 = vperm.xlu0 %266, %v237
      %v268 = vpop.permute.xlu0 %267
      %271 = vset.pattern.permute.xlu0 0
      %272 = vperm.xlu0 %271, %v238
      %v273 = vpop.permute.xlu0 %272
      %276 = vset.pattern.permute.xlu0 0
      %277 = vperm.xlu0 %276, %v239
      %v278 = vpop.permute.xlu0 %277
      %281 = vset.pattern.permute.xlu0 0
      %282 = vperm.xlu0 %281, %v240
      %v283 = vpop.permute.xlu0 %282
      %286 = vset.pattern.permute.xlu0 0
      %287 = vperm.xlu0 %286, %v241
      %v288 = vpop.permute.xlu0 %287
      %291 = vset.pattern.permute.xlu0 0
      %292 = vperm.xlu0 %291, %v242
      %v293 = vpop.permute.xlu0 %292
      %296 = vset.pattern.permute.xlu0 0
      %297 = vperm.xlu0 %296, %v243
      %v298 = vpop.permute.xlu0 %297
      %301 = vset.pattern.permute.xlu0 0
      %302 = vperm.xlu0 %301, %v244
      %v303 = vpop.permute.xlu0 %302
      %306 = vset.pattern.permute.xlu0 0
      %307 = vperm.xlu0 %306, %v245
      %v308 = vpop.permute.xlu0 %307
      %311 = vset.pattern.permute.xlu0 0
      %312 = vperm.xlu0 %311, %v246
      %v313 = vpop.permute.xlu0 %312
      %316 = vset.pattern.permute.xlu0 0
      %317 = vperm.xlu0 %316, %v247
      %v318 = vpop.permute.xlu0 %317
      %321 = vset.pattern.permute.xlu0 0
      %322 = vperm.xlu0 %321, %v248
      %v323 = vpop.permute.xlu0 %322
      %326 = vset.pattern.permute.xlu0 0
      %327 = vperm.xlu0 %326, %v249
      %v328 = vpop.permute.xlu0 %327
      %v330 = vmul.f32 %v218, %v253
      %v331 = vmul.f32 %v219, %v258
      %v332 = vmul.f32 %v220, %v263
      %v333 = vmul.f32 %v221, %v268
      %v334 = vmul.f32 %v222, %v273
      %v335 = vmul.f32 %v223, %v278
      %v336 = vmul.f32 %v224, %v283
      %v337 = vmul.f32 %v225, %v288
      %v338 = vmul.f32 %v226, %v293
      %v339 = vmul.f32 %v227, %v298
      %v340 = vmul.f32 %v228, %v303
      %v341 = vmul.f32 %v229, %v308
      %v342 = vmul.f32 %v230, %v313
      %v343 = vmul.f32 %v231, %v318
      %v344 = vmul.f32 %v232, %v323
      %v345 = vmul.f32 %v233, %v328
      %v346 = vld [vmem:[%s2] sm:$0xff]
      %v347 = vld [vmem:[%s2 + $0x8] sm:$0xff]
      %v348 = vld [vmem:[%s2 + $0x10] sm:$0xff]
      %v349 = vld [vmem:[%s2 + $0x18] sm:$0xff]
      %v350 = vld [vmem:[%s2 + $0x20] sm:$0xff]
      %v351 = vld [vmem:[%s2 + $0x28] sm:$0xff]
      %v352 = vld [vmem:[%s2 + $0x30] sm:$0xff]
      %v353 = vld [vmem:[%s2 + $0x38] sm:$0xff]
      %v354 = vld [vmem:[%s2 + $0x40] sm:$0xff]
      %v355 = vld [vmem:[%s2 + $0x48] sm:$0xff]
      %v356 = vld [vmem:[%s2 + $0x50] sm:$0xff]
      %v357 = vld [vmem:[%s2 + $0x58] sm:$0xff]
      %v358 = vld [vmem:[%s2 + $0x60] sm:$0xff]
      %v359 = vld [vmem:[%s2 + $0x68] sm:$0xff]
      %v360 = vld [vmem:[%s2 + $0x70] sm:$0xff]
      %v361 = vld [vmem:[%s2 + $0x78] sm:$0xff]
      %363 = vset.pattern.permute.xlu0 0
      %364 = vperm.xlu0 %363, %v346
      %v365 = vpop.permute.xlu0 %364
      %368 = vset.pattern.permute.xlu0 0
      %369 = vperm.xlu0 %368, %v347
      %v370 = vpop.permute.xlu0 %369
      %373 = vset.pattern.permute.xlu0 0
      %374 = vperm.xlu0 %373, %v348
      %v375 = vpop.permute.xlu0 %374
      %378 = vset.pattern.permute.xlu0 0
      %379 = vperm.xlu0 %378, %v349
      %v380 = vpop.permute.xlu0 %379
      %383 = vset.pattern.permute.xlu0 0
      %384 = vperm.xlu0 %383, %v350
      %v385 = vpop.permute.xlu0 %384
      %388 = vset.pattern.permute.xlu0 0
      %389 = vperm.xlu0 %388, %v351
      %v390 = vpop.permute.xlu0 %389
      %393 = vset.pattern.permute.xlu0 0
      %394 = vperm.xlu0 %393, %v352
      %v395 = vpop.permute.xlu0 %394
      %398 = vset.pattern.permute.xlu0 0
      %399 = vperm.xlu0 %398, %v353
      %v400 = vpop.permute.xlu0 %399
      %403 = vset.pattern.permute.xlu0 0
      %404 = vperm.xlu0 %403, %v354
      %v405 = vpop.permute.xlu0 %404
      %408 = vset.pattern.permute.xlu0 0
      %409 = vperm.xlu0 %408, %v355
      %v410 = vpop.permute.xlu0 %409
      %413 = vset.pattern.permute.xlu0 0
      %414 = vperm.xlu0 %413, %v356
      %v415 = vpop.permute.xlu0 %414
      %418 = vset.pattern.permute.xlu0 0
      %419 = vperm.xlu0 %418, %v357
      %v420 = vpop.permute.xlu0 %419
      %423 = vset.pattern.permute.xlu0 0
      %424 = vperm.xlu0 %423, %v358
      %v425 = vpop.permute.xlu0 %424
      %428 = vset.pattern.permute.xlu0 0
      %429 = vperm.xlu0 %428, %v359
      %v430 = vpop.permute.xlu0 %429
      %433 = vset.pattern.permute.xlu0 0
      %434 = vperm.xlu0 %433, %v360
      %v435 = vpop.permute.xlu0 %434
      %438 = vset.pattern.permute.xlu0 0
      %439 = vperm.xlu0 %438, %v361
      %v440 = vpop.permute.xlu0 %439
      %v442 = vadd.f32 %v330, %v365
      %v443 = vadd.f32 %v331, %v370
      %v444 = vadd.f32 %v332, %v375
      %v445 = vadd.f32 %v333, %v380
      %v446 = vadd.f32 %v334, %v385
      %v447 = vadd.f32 %v335, %v390
      %v448 = vadd.f32 %v336, %v395
      %v449 = vadd.f32 %v337, %v400
      %v450 = vadd.f32 %v338, %v405
      %v451 = vadd.f32 %v339, %v410
      %v452 = vadd.f32 %v340, %v415
      %v453 = vadd.f32 %v341, %v420
      %v454 = vadd.f32 %v342, %v425
      %v455 = vadd.f32 %v343, %v430
      %v456 = vadd.f32 %v344, %v435
      %v457 = vadd.f32 %v345, %v440
      %v458 = vmax.f32 %v442, 0.0
      %v459 = vmax.f32 %v443, 0.0
      %v460 = vmax.f32 %v444, 0.0
      %v461 = vmax.f32 %v445, 0.0
      %v462 = vmax.f32 %v446, 0.0
      %v463 = vmax.f32 %v447, 0.0
      %v464 = vmax.f32 %v448, 0.0
      %v465 = vmax.f32 %v449, 0.0
      %v466 = vmax.f32 %v450, 0.0
      %v467 = vmax.f32 %v451, 0.0
      %v468 = vmax.f32 %v452, 0.0
      %v469 = vmax.f32 %v453, 0.0
      %v470 = vmax.f32 %v454, 0.0
      %v471 = vmax.f32 %v455, 0.0
      %v472 = vmax.f32 %v456, 0.0
      %v473 = vmax.f32 %v457, 0.0
      %vm474 = vcmask 523264
      %475 = vst.msk [vmem:[%s201] sm:$0xff] %vm474, %v458
      %476 = vst.msk [vmem:[%s201 + $0x8] sm:$0xff] %vm474, %v459
      %477 = vst.msk [vmem:[%s201 + $0x10] sm:$0xff] %vm474, %v460
      %478 = vst.msk [vmem:[%s201 + $0x18] sm:$0xff] %vm474, %v461
      %479 = vst.msk [vmem:[%s201 + $0x20] sm:$0xff] %vm474, %v462
      %480 = vst.msk [vmem:[%s201 + $0x28] sm:$0xff] %vm474, %v463
      %481 = vst.msk [vmem:[%s201 + $0x30] sm:$0xff] %vm474, %v464
      %482 = vst.msk [vmem:[%s201 + $0x38] sm:$0xff] %vm474, %v465
      %483 = vst.msk [vmem:[%s201 + $0x40] sm:$0xff] %vm474, %v466
      %484 = vst.msk [vmem:[%s201 + $0x48] sm:$0xff] %vm474, %v467
      %485 = vst.msk [vmem:[%s201 + $0x50] sm:$0xff] %vm474, %v468
      %486 = vst.msk [vmem:[%s201 + $0x58] sm:$0xff] %vm474, %v469
      %487 = vst.msk [vmem:[%s201 + $0x60] sm:$0xff] %vm474, %v470
      %488 = vst.msk [vmem:[%s201 + $0x68] sm:$0xff] %vm474, %v471
      %489 = vst.msk [vmem:[%s201 + $0x70] sm:$0xff] %vm474, %v472
      %490 = vst.msk [vmem:[%s201 + $0x78] sm:$0xff] %vm474, %v473
      %p491 = scmp.lt.s32.totalorder %s18, 1
      %s492 = scalar_select %p491, %s18, 1
      %p493 = scmp.lt.s32.totalorder %s19, 0
      %s494 = scalar_select %p493, %s19, 0
      %s495 = smul.addr %s492, 16
      %s496 = sadd.s32 %s494, %s495
      %s497 = smul.addr %s496, 8
      %s498 = scalar_lea.vmem %s3, %s497
      // Predicated region
      $region33: #{down_forward.3} parent=31 // pred_check
        %p499 = pneg %p116
      $region34: #{down_forward.3} parent=31 // pred_check_branch
        %501 = sbr.rel (%p499) target = $region36
      $region35: #{down_forward.3} parent=31 // pred_region
        _
      $region36: #{down_forward.3} parent=31 // pred_fallthru
        _
    $region32: #{down_forward.3} parent=5 // pred_fallthru
      _
    %p502 = scmp.le.s32.totalorder 2, %s9
    // Predicated region
    $region37: #{down_forward.3} parent=5 // pred_check
      %p503 = pneg %p502
    $region38: #{down_forward.3} parent=5 // pred_check_branch
      %505 = sbr.rel (%p503) target = $region40
    $region39: #{down_forward.3} parent=5 // pred_region
      %s506 = ssub.s32 %s9, 2
      // Predicated region
      $region41: #{down_forward.3} parent=39 // pred_check
        %p507 = pneg %p122
      $region42: #{down_forward.3} parent=39 // pred_check_branch
        %509 = sbr.rel (%p507) target = $region44
      $region43: #{down_forward.3} parent=39 // pred_region
        %p510 = scmp.lt.s32.totalorder %s20, 1
        %s511 = scalar_select %p510, %s20, 1
        %p512 = scmp.lt.s32.totalorder %s21, 0
        %s513 = scalar_select %p512, %s21, 0
        %s514 = smul.addr %s511, 16
        %s515 = sadd.s32 %s513, %s514
        %s516 = smul.addr %s515, 8
        %s517 = scalar_lea.vmem %s3, %s516
      $region44: #{down_forward.3} parent=39 // pred_fallthru
        _
    $region40: #{down_forward.3} parent=5 // pred_fallthru
      _
  $region6: #{down_forward.3} parent=0 // loop_footer
    %s13 = sadd.s32 1, %s9
  $region7: #{down_forward.3} parent=0 // loop_footer_branch
    %8 = sbr.rel target = $region3
  $region8: #{down_forward.3} parent=0 // loop_exit
    _

// kernel: down_forward.2
$region0: #{down_forward.2}
  #allocation0 [shape = 'u32[]', space=smem, size = 0x4, offset = 0x4, fixed_abs, tag = 'smem constant byte address 0x4 - core index']
  #allocation1 [shape = 'u32[144,128]{1,0:T(1,128)}', space=vmem, size = 0x12000, scoped, tag = 'internal scratch']
  %s0 = inlined_call_operand.vmem [shape: bf16[2,128,64], index: 0, kind: input, shape index: {}]
  %s1 = inlined_call_operand.vmem [shape: bf16[128,128], index: 1, kind: input, shape index: {}]
  %s2 = inlined_call_operand.vmem [shape: bf16[2,128,64], index: 2, kind: output, shape index: {0}]
  %s3 = inlined_call_operand.vmem [shape: f32[2,128,128], index: 3, kind: output, shape index: {1}]
  %s4 = inlined_call_operand.vmem [shape: f32[2,128,128], index: 4, kind: output, shape index: {2}]
  %5 = xla_tuple %s2, %s3, %s4
  %s6 = sld [smem:[#allocation0]]
  $region61: #{down_forward.2} parent=0
    _
  %s8 = ssub.s32 1, %s6
  %s9 = scalar_select 0, %s8, %s6
  loop: start=0, step=1, limit=4
  $region2: #{down_forward.2} parent=0 // loop_pre_header
    _
  $region3: #{down_forward.2} parent=0 // loop_header
    %s11 = sphi 0, %s15
    %p12 = scmp.ge.s32.totalorder %s11, 4
    %s18 = sphi 0, %s30
    %s19 = sphi 0, %s26
    %s20 = sphi 0, %s18
    %s21 = sphi 0, %s19
    %s22 = sphi 0, %s20
    %s23 = sphi 0, %s21
    %s35 = sphi 0, %s37
    %s38 = sphi 0, %s35
    %s39 = sphi 0, %s38
    %s55 = sphi 0, %s39
    %s59 = sphi 0, %s59
    %s61 = sphi 0, %s59
    %s62 = sphi 0, %s61
    %s76 = sphi 0, %s62
    %s84 = sphi 0, %s86
    %s87 = sphi 0, %s84
    %s88 = sphi 0, %s87
    %s104 = sphi 0, %s88
    %s110 = sphi 0, %s112
    %s113 = sphi 0, %s110
    %s114 = sphi 0, %s113
    %s130 = sphi 0, %s114
    %s136 = sphi 0, %s138
    %s139 = sphi 0, %s136
    %s140 = sphi 0, %s139
    %s156 = sphi 0, %s140
  $region4: #{down_forward.2} parent=0 // loop_header_branch
    %14 = sbr.rel (%p12) target = $region8
  $region5: #{down_forward.2} parent=0 // loop_body
    %s16 = ssub.s32 %s11, 1
    %s17 = ssub.s32 %s11, 2
    %s24 = sadd.s32 1, %s19
    %p25 = scmp.ge.s32.totalorder %s24, 1
    %s26 = scalar_select %p25, 0, %s24
    %s27 = sadd.s32 1, %s18
    %s28 = scalar_select %p25, %s27, %s18
    %p29 = scmp.ge.s32.totalorder %s28, 2
    %s30 = scalar_select %p29, 0, %s28
    %s31 = ssub.s32 %s18, %s30
    %s32 = ssub.s32 %s19, %s26
    %s33 = sor.u32 %s31, %s32
    %p34 = scmp.eq.s32.totalorder %s33, 0
    %s36 = sadd.s32 %s35, 1
    %s37 = scalar_select %p34, %s35, %s36
    %p40 = pneg %p34
    %p41 = scmp.eq.s32.totalorder %s11, 1
    %p42 = por %p40, %p41
    %p43 = scmp.ne.s32.totalorder %s35, %s38
    %p44 = scmp.eq.s32.totalorder %s11, 0
    %p45 = por %p43, %p44
    %p46 = scmp.ne.s32.totalorder %s35, %s38
    %p47 = scmp.eq.s32.totalorder %s16, 1
    %p48 = por %p46, %p47
    %p49 = scmp.ne.s32.totalorder %s38, %s39
    %p50 = scmp.eq.s32.totalorder %s16, 0
    %p51 = por %p49, %p50
    %p52 = scmp.ne.s32.totalorder %s38, %s39
    %p53 = scmp.eq.s32.totalorder %s17, 1
    %p54 = por %p52, %p53
    %p56 = scmp.ne.s32.totalorder %s39, %s55
    %p57 = scmp.eq.s32.totalorder %s17, 0
    %p58 = por %p56, %p57
    %s60 = sadd.s32 %s59, 1
    %p63 = scmp.eq.s32.totalorder %s11, 1
    %p64 = scmp.ne.s32.totalorder %s59, %s61
    %p65 = scmp.eq.s32.totalorder %s11, 0
    %p66 = por %p64, %p65
    %p67 = scmp.ne.s32.totalorder %s59, %s61
    %p68 = scmp.eq.s32.totalorder %s16, 1
    %p69 = por %p67, %p68
    %p70 = scmp.ne.s32.totalorder %s61, %s62
    %p71 = scmp.eq.s32.totalorder %s16, 0
    %p72 = por %p70, %p71
    %p73 = scmp.ne.s32.totalorder %s61, %s62
    %p74 = scmp.eq.s32.totalorder %s17, 1
    %p75 = por %p73, %p74
    %p77 = scmp.ne.s32.totalorder %s62, %s76
    %p78 = scmp.eq.s32.totalorder %s17, 0
    %p79 = por %p77, %p78
    %s80 = ssub.s32 %s18, %s30
    %s81 = ssub.s32 %s19, %s26
    %s82 = sor.u32 %s80, %s81
    %p83 = scmp.eq.s32.totalorder %s82, 0
    %s85 = sadd.s32 %s84, 1
    %s86 = scalar_select %p83, %s84, %s85
    %p89 = pneg %p83
    %p90 = scmp.eq.s32.totalorder %s11, 1
    %p91 = por %p89, %p90
    %p92 = scmp.ne.s32.totalorder %s84, %s87
    %p93 = scmp.eq.s32.totalorder %s11, 0
    %p94 = por %p92, %p93
    %p95 = scmp.ne.s32.totalorder %s84, %s87
    %p96 = scmp.eq.s32.totalorder %s16, 1
    %p97 = por %p95, %p96
    %p98 = scmp.ne.s32.totalorder %s87, %s88
    %p99 = scmp.eq.s32.totalorder %s16, 0
    %p100 = por %p98, %p99
    %p101 = scmp.ne.s32.totalorder %s87, %s88
    %p102 = scmp.eq.s32.totalorder %s17, 1
    %p103 = por %p101, %p102
    %p105 = scmp.ne.s32.totalorder %s88, %s104
    %p106 = scmp.eq.s32.totalorder %s17, 0
    %p107 = por %p105, %p106
    %s108 = ssub.s32 %s18, %s30
    %p109 = scmp.eq.s32.totalorder %s108, 0
    %s111 = sadd.s32 %s110, 1
    %s112 = scalar_select %p109, %s110, %s111
    %p115 = pneg %p109
    %p116 = scmp.eq.s32.totalorder %s11, 1
    %p117 = por %p115, %p116
    %p118 = scmp.ne.s32.totalorder %s110, %s113
    %p119 = scmp.eq.s32.totalorder %s11, 0
    %p120 = por %p118, %p119
    %p121 = scmp.ne.s32.totalorder %s110, %s113
    %p122 = scmp.eq.s32.totalorder %s16, 1
    %p123 = por %p121, %p122
    %p124 = scmp.ne.s32.totalorder %s113, %s114
    %p125 = scmp.eq.s32.totalorder %s16, 0
    %p126 = por %p124, %p125
    %p127 = scmp.ne.s32.totalorder %s113, %s114
    %p128 = scmp.eq.s32.totalorder %s17, 1
    %p129 = por %p127, %p128
    %p131 = scmp.ne.s32.totalorder %s114, %s130
    %p132 = scmp.eq.s32.totalorder %s17, 0
    %p133 = por %p131, %p132
    %s134 = ssub.s32 %s18, %s30
    %p135 = scmp.eq.s32.totalorder %s134, 0
    %s137 = sadd.s32 %s136, 1
    %s138 = scalar_select %p135, %s136, %s137
    %p141 = pneg %p135
    %p142 = scmp.eq.s32.totalorder %s11, 1
    %p143 = por %p141, %p142
    %p144 = scmp.ne.s32.totalorder %s136, %s139
    %p145 = scmp.eq.s32.totalorder %s11, 0
    %p146 = por %p144, %p145
    %p147 = scmp.ne.s32.totalorder %s136, %s139
    %p148 = scmp.eq.s32.totalorder %s16, 1
    %p149 = por %p147, %p148
    %p150 = scmp.ne.s32.totalorder %s139, %s140
    %p151 = scmp.eq.s32.totalorder %s16, 0
    %p152 = por %p150, %p151
    %p153 = scmp.ne.s32.totalorder %s139, %s140
    %p154 = scmp.eq.s32.totalorder %s17, 1
    %p155 = por %p153, %p154
    %p157 = scmp.ne.s32.totalorder %s140, %s156
    %p158 = scmp.eq.s32.totalorder %s17, 0
    %p159 = por %p157, %p158
    %p160 = scmp.le.s32.totalorder 1, %s11
    %p161 = scmp.lt.s32.totalorder %s11, 3
    %p162 = pnand %p160, %p161
    %p163 = pneg %p162
    // Predicated region
    $region9: #{down_forward.2} parent=5 // pred_check
      _
    $region10: #{down_forward.2} parent=5 // pred_check_branch
      %165 = sbr.rel (%p162) target = $region12
    $region11: #{down_forward.2} parent=5 // pred_region
      %s166 = ssub.s32 %s11, 1
      // Predicated region
      $region13: #{down_forward.2} parent=11 // pred_check
        %p167 = pneg %p72
      $region14: #{down_forward.2} parent=11 // pred_check_branch
        %169 = sbr.rel (%p167) target = $region16
      $region15: #{down_forward.2} parent=11 // pred_region
        _
      $region16: #{down_forward.2} parent=11 // pred_fallthru
        _
    $region12: #{down_forward.2} parent=5 // pred_fallthru
      _
    %p170 = scmp.lt.s32.totalorder %s11, 2
    // Predicated region
    $region17: #{down_forward.2} parent=5 // pred_check
      %p171 = pneg %p170
    $region18: #{down_forward.2} parent=5 // pred_check_branch
      %173 = sbr.rel (%p171) target = $region20
    $region19: #{down_forward.2} parent=5 // pred_region
      // Predicated region
      $region21: #{down_forward.2} parent=19 // pred_check
        %p174 = pneg %p45
      $region22: #{down_forward.2} parent=19 // pred_check_branch
        %176 = sbr.rel (%p174) target = $region24
      $region23: #{down_forward.2} parent=19 // pred_region
        %p177 = scmp.lt.s32.totalorder %s18, 1
        %s178 = scalar_select %p177, %s18, 1
        %p179 = scmp.lt.s32.totalorder %s19, 0
        %s180 = scalar_select %p179, %s19, 0
        %s181 = smul.addr %s178, 16
        %s182 = sadd.s32 %s180, %s181
        %s183 = smul.addr %s182, 4
        %s184 = scalar_lea.vmem %s0, %s183
      $region24: #{down_forward.2} parent=19 // pred_fallthru
        _
    $region20: #{down_forward.2} parent=5 // pred_fallthru
      _
    %p185 = scmp.le.s32.totalorder 1, %s11
    %p186 = scmp.lt.s32.totalorder %s11, 3
    %p187 = pnand %p185, %p186
    %p188 = pneg %p187
    // Predicated region
    $region25: #{down_forward.2} parent=5 // pred_check
      _
    $region26: #{down_forward.2} parent=5 // pred_check_branch
      %190 = sbr.rel (%p187) target = $region28
    $region27: #{down_forward.2} parent=5 // pred_region
      %s191 = ssub.s32 %s11, 1
      %p192 = scmp.lt.s32.totalorder %s20, 1
      %s193 = scalar_select %p192, %s20, 1
      %p194 = scmp.lt.s32.totalorder %s21, 0
      %s195 = scalar_select %p194, %s21, 0
      %s196 = smul.addr %s193, 16
      %s197 = sadd.s32 %s195, %s196
      %s198 = smul.addr %s197, 4
      %s199 = scalar_lea.vmem %s0, %s198
      %p200 = pneg %p51
      %p201 = pneg %p48
      %p202 = pneg %p72
      %p203 = pneg %p69
      %p204 = pneg %p100
      %p205 = pneg %p97
      %p206 = scmp.lt.s32.totalorder %s20, 1
      %s207 = scalar_select %p206, %s20, 1
      %p208 = scmp.lt.s32.totalorder %s21, 0
      %s209 = scalar_select %p208, %s21, 0
      %s210 = smul.addr %s207, 16
      %s211 = sadd.s32 %s209, %s210
      %s212 = smul.addr %s211, 4
      %s213 = scalar_lea.vmem %s2, %s212
      %p214 = pneg %p126
      %p215 = pneg %p123
      %p216 = scmp.lt.s32.totalorder %s20, 1
      %s217 = scalar_select %p216, %s20, 1
      %s218 = smul.addr %s217, 16
      %s219 = smul.addr %s218, 8
      %s220 = scalar_lea.vmem %s3, %s219
      %p221 = pneg %p152
      %p222 = pneg %p149
      %p223 = scmp.lt.s32.totalorder %s20, 1
      %s224 = scalar_select %p223, %s20, 1
      %s225 = smul.addr %s224, 16
      %s226 = smul.addr %s225, 8
      %s227 = scalar_lea.vmem %s4, %s226
      %p228 = scmp.lt.s32.totalorder %s20, 1
      %s229 = scalar_select %p228, %s20, 1
      %p230 = scmp.lt.s32.totalorder %s21, 0
      %s231 = scalar_select %p230, %s21, 0
      %s232 = smul.addr %s229, 16
      %s233 = sadd.s32 %s231, %s232
      %s234 = smul.addr %s233, 4
      %s235 = scalar_lea.vmem %s0, %s234
      %p236 = scmp.lt.s32.totalorder %s20, 1
      %s237 = scalar_select %p236, %s20, 1
      %p238 = scmp.lt.s32.totalorder %s21, 0
      %s239 = scalar_select %p238, %s21, 0
      %s240 = smul.addr %s237, 16
      %s241 = sadd.s32 %s239, %s240
      %s242 = smul.addr %s241, 4
      %s243 = scalar_lea.vmem %s2, %s242
      %p244 = scmp.lt.s32.totalorder %s20, 1
      %s245 = scalar_select %p244, %s20, 1
      %s246 = smul.addr %s245, 16
      %s247 = smul.addr %s246, 8
      %s248 = scalar_lea.vmem %s3, %s247
      %p249 = scmp.lt.s32.totalorder %s20, 1
      %s250 = scalar_select %p249, %s20, 1
      %s251 = smul.addr %s250, 16
      %s252 = smul.addr %s251, 8
      %s253 = scalar_lea.vmem %s4, %s252
      %p255 = scmp.eq.s32.totalorder %s21, 0
      // Predicated region
      $region29: #{down_forward.2} parent=27 // pred_check
        %p256 = pneg %p255
      $region30: #{down_forward.2} parent=27 // pred_check_branch
        %258 = sbr.rel (%p256) target = $region32
      $region31: #{down_forward.2} parent=27 // pred_region
        %259 = vst [vmem:[%s248] sm:$0xff] 0.0
        %260 = vst [vmem:[%s248 + $0x8] sm:$0xff] 0.0
        %261 = vst [vmem:[%s248 + $0x10] sm:$0xff] 0.0
        %262 = vst [vmem:[%s248 + $0x18] sm:$0xff] 0.0
        %263 = vst [vmem:[%s248 + $0x20] sm:$0xff] 0.0
        %264 = vst [vmem:[%s248 + $0x28] sm:$0xff] 0.0
        %265 = vst [vmem:[%s248 + $0x30] sm:$0xff] 0.0
        %266 = vst [vmem:[%s248 + $0x38] sm:$0xff] 0.0
        %267 = vst [vmem:[%s248 + $0x40] sm:$0xff] 0.0
        %268 = vst [vmem:[%s248 + $0x48] sm:$0xff] 0.0
        %269 = vst [vmem:[%s248 + $0x50] sm:$0xff] 0.0
        %270 = vst [vmem:[%s248 + $0x58] sm:$0xff] 0.0
        %271 = vst [vmem:[%s248 + $0x60] sm:$0xff] 0.0
        %272 = vst [vmem:[%s248 + $0x68] sm:$0xff] 0.0
        %273 = vst [vmem:[%s248 + $0x70] sm:$0xff] 0.0
        %274 = vst [vmem:[%s248 + $0x78] sm:$0xff] 0.0
        %275 = vst [vmem:[%s253] sm:$0xff] 0.0
        %276 = vst [vmem:[%s253 + $0x8] sm:$0xff] 0.0
        %277 = vst [vmem:[%s253 + $0x10] sm:$0xff] 0.0
        %278 = vst [vmem:[%s253 + $0x18] sm:$0xff] 0.0
        %279 = vst [vmem:[%s253 + $0x20] sm:$0xff] 0.0
        %280 = vst [vmem:[%s253 + $0x28] sm:$0xff] 0.0
        %281 = vst [vmem:[%s253 + $0x30] sm:$0xff] 0.0
        %282 = vst [vmem:[%s253 + $0x38] sm:$0xff] 0.0
        %283 = vst [vmem:[%s253 + $0x40] sm:$0xff] 0.0
        %284 = vst [vmem:[%s253 + $0x48] sm:$0xff] 0.0
        %285 = vst [vmem:[%s253 + $0x50] sm:$0xff] 0.0
        %286 = vst [vmem:[%s253 + $0x58] sm:$0xff] 0.0
        %287 = vst [vmem:[%s253 + $0x60] sm:$0xff] 0.0
        %288 = vst [vmem:[%s253 + $0x68] sm:$0xff] 0.0
        %289 = vst [vmem:[%s253 + $0x70] sm:$0xff] 0.0
        %290 = vst [vmem:[%s253 + $0x78] sm:$0xff] 0.0
      $region32: #{down_forward.2} parent=27 // pred_fallthru
        _
      %v291 = vld [vmem:[%s1] sm:$0xf]
      %v292 = vld [vmem:[%s1 + $0x4] sm:$0xf]
      %v293 = vld [vmem:[%s1 + $0x8] sm:$0xf]
      %v294 = vld [vmem:[%s1 + $0xc] sm:$0xf]
      %v295 = vld [vmem:[%s1 + $0x10] sm:$0xf]
      %v296 = vld [vmem:[%s1 + $0x14] sm:$0xf]
      %v297 = vld [vmem:[%s1 + $0x18] sm:$0xf]
      %v298 = vld [vmem:[%s1 + $0x1c] sm:$0xf]
      %v299 = vld [vmem:[%s1 + $0x20] sm:$0xf]
      %v300 = vld [vmem:[%s1 + $0x24] sm:$0xf]
      %v301 = vld [vmem:[%s1 + $0x28] sm:$0xf]
      %v302 = vld [vmem:[%s1 + $0x2c] sm:$0xf]
      %v303 = vld [vmem:[%s1 + $0x30] sm:$0xf]
      %v304 = vld [vmem:[%s1 + $0x34] sm:$0xf]
      %v305 = vld [vmem:[%s1 + $0x38] sm:$0xf]
      %v306 = vld [vmem:[%s1 + $0x3c] sm:$0xf]
      %v307 = vld [vmem:[%s235] sm:$0xf]
      %v308 = vld [vmem:[%s235 + $0x4] sm:$0xf]
      %v309 = vld [vmem:[%s235 + $0x8] sm:$0xf]
      %v310 = vld [vmem:[%s235 + $0xc] sm:$0xf]
      %v311 = vld [vmem:[%s235 + $0x10] sm:$0xf]
      %v312 = vld [vmem:[%s235 + $0x14] sm:$0xf]
      %v313 = vld [vmem:[%s235 + $0x18] sm:$0xf]
      %v314 = vld [vmem:[%s235 + $0x1c] sm:$0xf]
      %v315 = vld [vmem:[%s235 + $0x20] sm:$0xf]
      %v316 = vld [vmem:[%s235 + $0x24] sm:$0xf]
      %v317 = vld [vmem:[%s235 + $0x28] sm:$0xf]
      %v318 = vld [vmem:[%s235 + $0x2c] sm:$0xf]
      %v319 = vld [vmem:[%s235 + $0x30] sm:$0xf]
      %v320 = vld [vmem:[%s235 + $0x34] sm:$0xf]
      %v321 = vld [vmem:[%s235 + $0x38] sm:$0xf]
      %v322 = vld [vmem:[%s235 + $0x3c] sm:$0xf]
      %v339 = vunpack.c.l.b16 %v291
      %v340 = vunpack.c.l.b16 %v292
      %v341 = vunpack.c.l.b16 %v293
      %v342 = vunpack.c.l.b16 %v294
      %v343 = vunpack.c.l.b16 %v295
      %v344 = vunpack.c.l.b16 %v296
      %v345 = vunpack.c.l.b16 %v297
      %v346 = vunpack.c.l.b16 %v298
      %v347 = vunpack.c.l.b16 %v299
      %v348 = vunpack.c.l.b16 %v300
      %v349 = vunpack.c.l.b16 %v301
      %v350 = vunpack.c.l.b16 %v302
      %v351 = vunpack.c.l.b16 %v303
      %v352 = vunpack.c.l.b16 %v304
      %v353 = vunpack.c.l.b16 %v305
      %v354 = vunpack.c.l.b16 %v306
      %v355 = vpack.c.b16 %v340, %v339
      %v356 = vpack.c.b16 %v342, %v341
      %v357 = vpack.c.b16 %v344, %v343
      %v358 = vpack.c.b16 %v346, %v345
      %v359 = vpack.c.b16 %v348, %v347
      %v360 = vpack.c.b16 %v350, %v349
      %v361 = vpack.c.b16 %v352, %v351
      %v362 = vpack.c.b16 %v354, %v353
      %v387 = vunpack.c.l.b16 %v307
      %v388 = vunpack.c.l.b16 %v308
      %v389 = vunpack.c.l.b16 %v309
      %v390 = vunpack.c.l.b16 %v310
      %v391 = vunpack.c.l.b16 %v311
      %v392 = vunpack.c.l.b16 %v312
      %v393 = vunpack.c.l.b16 %v313
      %v394 = vunpack.c.l.b16 %v314
      %v395 = vunpack.c.l.b16 %v315
      %v396 = vunpack.c.l.b16 %v316
      %v397 = vunpack.c.l.b16 %v317
      %v398 = vunpack.c.l.b16 %v318
      %v399 = vunpack.c.l.b16 %v319
      %v400 = vunpack.c.l.b16 %v320
      %v401 = vunpack.c.l.b16 %v321
      %v402 = vunpack.c.l.b16 %v322
      %v403 = vpack.c.b16 %v388, %v387
      %v404 = vpack.c.b16 %v390, %v389
      %v405 = vpack.c.b16 %v392, %v391
      %v406 = vpack.c.b16 %v394, %v393
      %v407 = vpack.c.b16 %v396, %v395
      %v408 = vpack.c.b16 %v398, %v397
      %v409 = vpack.c.b16 %v400, %v399
      %v410 = vpack.c.b16 %v402, %v401
      %419 = vmatprep.subr.bf16.mxu0 0
      %420 = vmatpush1.bf16.msra.mxu0 %v403
      %421 = vmatprep.subr.bf16.mxu0 0
      %422 = vmatpush1.bf16.msra.mxu0 %v404
      %423 = vmatprep.subr.bf16.mxu0 0
      %424 = vmatpush1.bf16.msra.mxu0 %v405
      %425 = vmatprep.subr.bf16.mxu0 0
      %426 = vmatpush1.bf16.msra.mxu0 %v406
      %427 = vmatprep.subr.bf16.mxu0 0
      %428 = vmatpush1.bf16.msra.mxu0 %v407
      %429 = vmatprep.subr.bf16.mxu0 0
      %430 = vmatpush1.bf16.msra.mxu0 %v408
      %431 = vmatprep.subr.bf16.mxu0 0
      %432 = vmatpush1.bf16.msra.mxu0 %v409
      %433 = vmatprep.subr.bf16.mxu0 0
      %434 = vmatpush1.bf16.msra.mxu0 %v410
      %435 = vmatprep.subr.bf16.mxu0 0
      %436 = vmatpush1.bf16.msra.mxu0 0
      %437 = vmatprep.subr.bf16.mxu0 0
      %438 = vmatpush1.bf16.msra.mxu0 0
      %439 = vmatprep.subr.bf16.mxu0 0
      %440 = vmatpush1.bf16.msra.mxu0 0
      %441 = vmatprep.subr.bf16.mxu0 0
      %442 = vmatpush1.bf16.msra.mxu0 0
      %443 = vmatprep.subr.bf16.mxu0 0
      %444 = vmatpush1.bf16.msra.mxu0 0
      %445 = vmatprep.subr.bf16.mxu0 0
      %446 = vmatpush1.bf16.msra.mxu0 0
      %447 = vmatprep.subr.bf16.mxu0 0
      %448 = vmatpush1.bf16.msra.mxu0 0
      %449 = vmatprep.subr.bf16.mxu0 0
      %450 = vmatpush1.bf16.msra.mxu0 0
      %451 = vmatprep.mubr.bf16.mxu0 0
      %452 = vmatmul.mubr.bf16.gmra.mrb[0].mxu0 %v355
      %v453 = vpop.f32.mrb[0].mxu0
      %v454 = vadd.f32 0.0, %v453
      %v455 = vpop.f32.mrb[0].mxu0
      %v456 = vpop.f32.mrb[0].mxu0
      %v457 = vadd.f32 0.0, %v456
      %v458 = vpop.f32.mrb[0].mxu0
      %459 = vmatprep.mubr.bf16.mxu0 0
      %460 = vmatmul.mubr.bf16.gmra.mrb[0].mxu0 %v356
      %v461 = vpop.f32.mrb[0].mxu0
      %v462 = vadd.f32 0.0, %v461
      %v463 = vpop.f32.mrb[0].mxu0
      %v464 = vpop.f32.mrb[0].mxu0
      %v465 = vadd.f32 0.0, %v464
      %v466 = vpop.f32.mrb[0].mxu0
      %467 = vmatprep.mubr.bf16.mxu0 0
      %468 = vmatmul.mubr.bf16.gmra.mrb[0].mxu0 %v357
      %v469 = vpop.f32.mrb[0].mxu0
      %v470 = vadd.f32 0.0, %v469
      %v471 = vpop.f32.mrb[0].mxu0
      %v472 = vpop.f32.mrb[0].mxu0
      %v473 = vadd.f32 0.0, %v472
      %v474 = vpop.f32.mrb[0].mxu0
      %475 = vmatprep.mubr.bf16.mxu0 0
      %476 = vmatmul.mubr.bf16.gmra.mrb[0].mxu0 %v358
      %v477 = vpop.f32.mrb[0].mxu0
      %v478 = vadd.f32 0.0, %v477
      %v479 = vpop.f32.mrb[0].mxu0
      %v480 = vpop.f32.mrb[0].mxu0
      %v481 = vadd.f32 0.0, %v480
      %v482 = vpop.f32.mrb[0].mxu0
      %483 = vmatprep.mubr.bf16.mxu0 0
      %484 = vmatmul.mubr.bf16.gmra.mrb[0].mxu0 %v359
      %v485 = vpop.f32.mrb[0].mxu0
      %v486 = vadd.f32 0.0, %v485
      %v487 = vpop.f32.mrb[0].mxu0
      %v488 = vpop.f32.mrb[0].mxu0
      %v489 = vadd.f32 0.0, %v488
      %v490 = vpop.f32.mrb[0].mxu0
      %491 = vmatprep.mubr.bf16.mxu0 0
      %492 = vmatmul.mubr.bf16.gmra.mrb[0].mxu0 %v360
      %v493 = vpop.f32.mrb[0].mxu0
      %v494 = vadd.f32 0.0, %v493
      %v495 = vpop.f32.mrb[0].mxu0
      %v496 = vpop.f32.mrb[0].mxu0
      %v497 = vadd.f32 0.0, %v496
      %v498 = vpop.f32.mrb[0].mxu0
      %499 = vmatprep.mubr.bf16.mxu0 0
      %500 = vmatmul.mubr.bf16.gmra.mrb[0].mxu0 %v361
      %v501 = vpop.f32.mrb[0].mxu0
      %v502 = vadd.f32 0.0, %v501
      %v503 = vpop.f32.mrb[0].mxu0
      %v504 = vpop.f32.mrb[0].mxu0
      %v505 = vadd.f32 0.0, %v504
      %v506 = vpop.f32.mrb[0].mxu0
      %507 = vmatprep.mubr.bf16.mxu0 0
      %508 = vmatmul.mubr.bf16.gmra.mrb[0].mxu0 %v362
      %v509 = vpop.f32.mrb[0].mxu0
      %v510 = vadd.f32 0.0, %v509
      %v511 = vpop.f32.mrb[0].mxu0
      %v512 = vpop.f32.mrb[0].mxu0
      %v513 = vadd.f32 0.0, %v512
      %v514 = vpop.f32.mrb[0].mxu0
      %515 = vdwg.mxu0
      %v516 = vpack.c.bf16 %v457, %v454
      %v517 = vpack.c.bf16 %v465, %v462
      %v518 = vpack.c.bf16 %v473, %v470
      %v519 = vpack.c.bf16 %v481, %v478
      %v520 = vpack.c.bf16 %v489, %v486
      %v521 = vpack.c.bf16 %v497, %v494
      %v522 = vpack.c.bf16 %v505, %v502
      %v523 = vpack.c.bf16 %v513, %v510
      %v532 = vunpack.c.l.b16 %v516
      %v533 = vunpack.c.h.b16 %v516
      %v534 = vunpack.c.l.b16 %v517
      %v535 = vunpack.c.h.b16 %v517
      %v536 = vunpack.c.l.b16 %v518
      %v537 = vunpack.c.h.b16 %v518
      %v538 = vunpack.c.l.b16 %v519
      %v539 = vunpack.c.h.b16 %v519
      %v540 = vunpack.c.l.b16 %v520
      %v541 = vunpack.c.h.b16 %v520
      %v542 = vunpack.c.l.b16 %v521
      %v543 = vunpack.c.h.b16 %v521
      %v544 = vunpack.c.l.b16 %v522
      %v545 = vunpack.c.h.b16 %v522
      %v546 = vunpack.c.l.b16 %v523
      %v547 = vunpack.c.h.b16 %v523
      %v548 = vpack.c.b16 %v532, %v532
      %v549 = vpack.c.b16 %v533, %v533
      %v550 = vpack.c.b16 %v534, %v534
      %v551 = vpack.c.b16 %v535, %v535
      %v552 = vpack.c.b16 %v536, %v536
      %v553 = vpack.c.b16 %v537, %v537
      %v554 = vpack.c.b16 %v538, %v538
      %v555 = vpack.c.b16 %v539, %v539
      %v556 = vpack.c.b16 %v540, %v540
      %v557 = vpack.c.b16 %v541, %v541
      %v558 = vpack.c.b16 %v542, %v542
      %v559 = vpack.c.b16 %v543, %v543
      %v560 = vpack.c.b16 %v544, %v544
      %v561 = vpack.c.b16 %v545, %v545
      %v562 = vpack.c.b16 %v546, %v546
      %v563 = vpack.c.b16 %v547, %v547
      %vm580 = vcmask 519168
      %581 = vst.msk [vmem:[%s243] sm:$0xf] %vm580, %v548
      %582 = vst.msk [vmem:[%s243 + $0x4] sm:$0xf] %vm580, %v549
      %583 = vst.msk [vmem:[%s243 + $0x8] sm:$0xf] %vm580, %v550
      %584 = vst.msk [vmem:[%s243 + $0xc] sm:$0xf] %vm580, %v551
      %585 = vst.msk [vmem:[%s243 + $0x10] sm:$0xf] %vm580, %v552
      %586 = vst.msk [vmem:[%s243 + $0x14] sm:$0xf] %vm580, %v553
      %587 = vst.msk [vmem:[%s243 + $0x18] sm:$0xf] %vm580, %v554
      %588 = vst.msk [vmem:[%s243 + $0x1c] sm:$0xf] %vm580, %v555
      %589 = vst.msk [vmem:[%s243 + $0x20] sm:$0xf] %vm580, %v556
      %590 = vst.msk [vmem:[%s243 + $0x24] sm:$0xf] %vm580, %v557
      %591 = vst.msk [vmem:[%s243 + $0x28] sm:$0xf] %vm580, %v558
      %592 = vst.msk [vmem:[%s243 + $0x2c] sm:$0xf] %vm580, %v559
      %593 = vst.msk [vmem:[%s243 + $0x30] sm:$0xf] %vm580, %v560
      %594 = vst.msk [vmem:[%s243 + $0x34] sm:$0xf] %vm580, %v561
      %595 = vst.msk [vmem:[%s243 + $0x38] sm:$0xf] %vm580, %v562
      %596 = vst.msk [vmem:[%s243 + $0x3c] sm:$0xf] %vm580, %v563
      %v597 = vld [vmem:[%s248] sm:$0xff]
      %v598 = vld [vmem:[%s248 + $0x8] sm:$0xff]
      %v599 = vld [vmem:[%s248 + $0x10] sm:$0xff]
      %v600 = vld [vmem:[%s248 + $0x18] sm:$0xff]
      %v601 = vld [vmem:[%s248 + $0x20] sm:$0xff]
      %v602 = vld [vmem:[%s248 + $0x28] sm:$0xff]
      %v603 = vld [vmem:[%s248 + $0x30] sm:$0xff]
      %v604 = vld [vmem:[%s248 + $0x38] sm:$0xff]
      %v605 = vld [vmem:[%s248 + $0x40] sm:$0xff]
      %v606 = vld [vmem:[%s248 + $0x48] sm:$0xff]
      %v607 = vld [vmem:[%s248 + $0x50] sm:$0xff]
      %v608 = vld [vmem:[%s248 + $0x58] sm:$0xff]
      %v609 = vld [vmem:[%s248 + $0x60] sm:$0xff]
      %v610 = vld [vmem:[%s248 + $0x68] sm:$0xff]
      %v611 = vld [vmem:[%s248 + $0x70] sm:$0xff]
      %v612 = vld [vmem:[%s248 + $0x78] sm:$0xff]
      %vm613 = vcmask 523264
      %v614 = vsel %vm613, %v454, 0.0
      %615 = vadd.xlane.f32.xlu0 %v614
      %v616 = vpop.xlane.xlu0 %615
      %v617 = vsel %vm613, %v457, 0.0
      %618 = vadd.xlane.f32.xlu0 %v617
      %v619 = vpop.xlane.xlu0 %618
      %v620 = vsel %vm613, %v462, 0.0
      %621 = vadd.xlane.f32.xlu0 %v620
      %v622 = vpop.xlane.xlu0 %621
      %v623 = vsel %vm613, %v465, 0.0
      %624 = vadd.xlane.f32.xlu0 %v623
      %v625 = vpop.xlane.xlu0 %624
      %v626 = vsel %vm613, %v470, 0.0
      %627 = vadd.xlane.f32.xlu0 %v626
      %v628 = vpop.xlane.xlu0 %627
      %v629 = vsel %vm613, %v473, 0.0
      %630 = vadd.xlane.f32.xlu0 %v629
      %v631 = vpop.xlane.xlu0 %630
      %v632 = vsel %vm613, %v478, 0.0
      %633 = vadd.xlane.f32.xlu0 %v632
      %v634 = vpop.xlane.xlu0 %633
      %v635 = vsel %vm613, %v481, 0.0
      %636 = vadd.xlane.f32.xlu0 %v635
      %v637 = vpop.xlane.xlu0 %636
      %v638 = vsel %vm613, %v486, 0.0
      %639 = vadd.xlane.f32.xlu0 %v638
      %v640 = vpop.xlane.xlu0 %639
      %v641 = vsel %vm613, %v489, 0.0
      %642 = vadd.xlane.f32.xlu0 %v641
      %v643 = vpop.xlane.xlu0 %642
      %v644 = vsel %vm613, %v494, 0.0
      %645 = vadd.xlane.f32.xlu0 %v644
      %v646 = vpop.xlane.xlu0 %645
      %v647 = vsel %vm613, %v497, 0.0
      %648 = vadd.xlane.f32.xlu0 %v647
      %v649 = vpop.xlane.xlu0 %648
      %v650 = vsel %vm613, %v502, 0.0
      %651 = vadd.xlane.f32.xlu0 %v650
      %v652 = vpop.xlane.xlu0 %651
      %v653 = vsel %vm613, %v505, 0.0
      %654 = vadd.xlane.f32.xlu0 %v653
      %v655 = vpop.xlane.xlu0 %654
      %v656 = vsel %vm613, %v510, 0.0
      %657 = vadd.xlane.f32.xlu0 %v656
      %v658 = vpop.xlane.xlu0 %657
      %v659 = vsel %vm613, %v513, 0.0
      %660 = vadd.xlane.f32.xlu0 %v659
      %v661 = vpop.xlane.xlu0 %660
      %v662 = vadd.f32 %v597, %v616
      %v663 = vadd.f32 %v598, %v619
      %v664 = vadd.f32 %v599, %v622
      %v665 = vadd.f32 %v600, %v625
      %v666 = vadd.f32 %v601, %v628
      %v667 = vadd.f32 %v602, %v631
      %v668 = vadd.f32 %v603, %v634
      %v669 = vadd.f32 %v604, %v637
      %v670 = vadd.f32 %v605, %v640
      %v671 = vadd.f32 %v606, %v643
      %v672 = vadd.f32 %v607, %v646
      %v673 = vadd.f32 %v608, %v649
      %v674 = vadd.f32 %v609, %v652
      %v675 = vadd.f32 %v610, %v655
      %v676 = vadd.f32 %v611, %v658
      %v677 = vadd.f32 %v612, %v661
      %678 = vst [vmem:[%s248] sm:$0xff] %v662
      %679 = vst [vmem:[%s248 + $0x8] sm:$0xff] %v663
      %680 = vst [vmem:[%s248 + $0x10] sm:$0xff] %v664
      %681 = vst [vmem:[%s248 + $0x18] sm:$0xff] %v665
      %682 = vst [vmem:[%s248 + $0x20] sm:$0xff] %v666
      %683 = vst [vmem:[%s248 + $0x28] sm:$0xff] %v667
      %684 = vst [vmem:[%s248 + $0x30] sm:$0xff] %v668
      %685 = vst [vmem:[%s248 + $0x38] sm:$0xff] %v669
      %686 = vst [vmem:[%s248 + $0x40] sm:$0xff] %v670
      %687 = vst [vmem:[%s248 + $0x48] sm:$0xff] %v671
      %688 = vst [vmem:[%s248 + $0x50] sm:$0xff] %v672
      %689 = vst [vmem:[%s248 + $0x58] sm:$0xff] %v673
      %690 = vst [vmem:[%s248 + $0x60] sm:$0xff] %v674
      %691 = vst [vmem:[%s248 + $0x68] sm:$0xff] %v675
      %692 = vst [vmem:[%s248 + $0x70] sm:$0xff] %v676
      %693 = vst [vmem:[%s248 + $0x78] sm:$0xff] %v677
      %v694 = vld [vmem:[%s253] sm:$0xff]
      %v695 = vld [vmem:[%s253 + $0x8] sm:$0xff]
      %v696 = vld [vmem:[%s253 + $0x10] sm:$0xff]
      %v697 = vld [vmem:[%s253 + $0x18] sm:$0xff]
      %v698 = vld [vmem:[%s253 + $0x20] sm:$0xff]
      %v699 = vld [vmem:[%s253 + $0x28] sm:$0xff]
      %v700 = vld [vmem:[%s253 + $0x30] sm:$0xff]
      %v701 = vld [vmem:[%s253 + $0x38] sm:$0xff]
      %v702 = vld [vmem:[%s253 + $0x40] sm:$0xff]
      %v703 = vld [vmem:[%s253 + $0x48] sm:$0xff]
      %v704 = vld [vmem:[%s253 + $0x50] sm:$0xff]
      %v705 = vld [vmem:[%s253 + $0x58] sm:$0xff]
      %v706 = vld [vmem:[%s253 + $0x60] sm:$0xff]
      %v707 = vld [vmem:[%s253 + $0x68] sm:$0xff]
      %v708 = vld [vmem:[%s253 + $0x70] sm:$0xff]
      %v709 = vld [vmem:[%s253 + $0x78] sm:$0xff]
      %v710 = vmul.f32 %v454, %v454
      %v711 = vmul.f32 %v457, %v457
      %v712 = vmul.f32 %v462, %v462
      %v713 = vmul.f32 %v465, %v465
      %v714 = vmul.f32 %v470, %v470
      %v715 = vmul.f32 %v473, %v473
      %v716 = vmul.f32 %v478, %v478
      %v717 = vmul.f32 %v481, %v481
      %v718 = vmul.f32 %v486, %v486
      %v719 = vmul.f32 %v489, %v489
      %v720 = vmul.f32 %v494, %v494
      %v721 = vmul.f32 %v497, %v497
      %v722 = vmul.f32 %v502, %v502
      %v723 = vmul.f32 %v505, %v505
      %v724 = vmul.f32 %v510, %v510
      %v725 = vmul.f32 %v513, %v513
      %v726 = vsel %vm613, %v710, 0.0
      %727 = vadd.xlane.f32.xlu0 %v726
      %v728 = vpop.xlane.xlu0 %727
      %v729 = vsel %vm613, %v711, 0.0
      %730 = vadd.xlane.f32.xlu0 %v729
      %v731 = vpop.xlane.xlu0 %730
      %v732 = vsel %vm613, %v712, 0.0
      %733 = vadd.xlane.f32.xlu0 %v732
      %v734 = vpop.xlane.xlu0 %733
      %v735 = vsel %vm613, %v713, 0.0
      %736 = vadd.xlane.f32.xlu0 %v735
      %v737 = vpop.xlane.xlu0 %736
      %v738 = vsel %vm613, %v714, 0.0
      %739 = vadd.xlane.f32.xlu0 %v738
      %v740 = vpop.xlane.xlu0 %739
      %v741 = vsel %vm613, %v715, 0.0
      %742 = vadd.xlane.f32.xlu0 %v741
      %v743 = vpop.xlane.xlu0 %742
      %v744 = vsel %vm613, %v716, 0.0
      %745 = vadd.xlane.f32.xlu0 %v744
      %v746 = vpop.xlane.xlu0 %745
      %v747 = vsel %vm613, %v717, 0.0
      %748 = vadd.xlane.f32.xlu0 %v747
      %v749 = vpop.xlane.xlu0 %748
      %v750 = vsel %vm613, %v718, 0.0
      %751 = vadd.xlane.f32.xlu0 %v750
      %v752 = vpop.xlane.xlu0 %751
      %v753 = vsel %vm613, %v719, 0.0
      %754 = vadd.xlane.f32.xlu0 %v753
      %v755 = vpop.xlane.xlu0 %754
      %v756 = vsel %vm613, %v720, 0.0
      %757 = vadd.xlane.f32.xlu0 %v756
      %v758 = vpop.xlane.xlu0 %757
      %v759 = vsel %vm613, %v721, 0.0
      %760 = vadd.xlane.f32.xlu0 %v759
      %v761 = vpop.xlane.xlu0 %760
      %v762 = vsel %vm613, %v722, 0.0
      %763 = vadd.xlane.f32.xlu0 %v762
      %v764 = vpop.xlane.xlu0 %763
      %v765 = vsel %vm613, %v723, 0.0
      %766 = vadd.xlane.f32.xlu0 %v765
      %v767 = vpop.xlane.xlu0 %766
      %v768 = vsel %vm613, %v724, 0.0
      %769 = vadd.xlane.f32.xlu0 %v768
      %v770 = vpop.xlane.xlu0 %769
      %v771 = vsel %vm613, %v725, 0.0
      %772 = vadd.xlane.f32.xlu0 %v771
      %v773 = vpop.xlane.xlu0 %772
      %v774 = vadd.f32 %v694, %v728
      %v775 = vadd.f32 %v695, %v731
      %v776 = vadd.f32 %v696, %v734
      %v777 = vadd.f32 %v697, %v737
      %v778 = vadd.f32 %v698, %v740
      %v779 = vadd.f32 %v699, %v743
      %v780 = vadd.f32 %v700, %v746
      %v781 = vadd.f32 %v701, %v749
      %v782 = vadd.f32 %v702, %v752
      %v783 = vadd.f32 %v703, %v755
      %v784 = vadd.f32 %v704, %v758
      %v785 = vadd.f32 %v705, %v761
      %v786 = vadd.f32 %v706, %v764
      %v787 = vadd.f32 %v707, %v767
      %v788 = vadd.f32 %v708, %v770
      %v789 = vadd.f32 %v709, %v773
      %790 = vst [vmem:[%s253] sm:$0xff] %v774
      %791 = vst [vmem:[%s253 + $0x8] sm:$0xff] %v775
      %792 = vst [vmem:[%s253 + $0x10] sm:$0xff] %v776
      %793 = vst [vmem:[%s253 + $0x18] sm:$0xff] %v777
      %794 = vst [vmem:[%s253 + $0x20] sm:$0xff] %v778
      %795 = vst [vmem:[%s253 + $0x28] sm:$0xff] %v779
      %796 = vst [vmem:[%s253 + $0x30] sm:$0xff] %v780
      %797 = vst [vmem:[%s253 + $0x38] sm:$0xff] %v781
      %798 = vst [vmem:[%s253 + $0x40] sm:$0xff] %v782
      %799 = vst [vmem:[%s253 + $0x48] sm:$0xff] %v783
      %800 = vst [vmem:[%s253 + $0x50] sm:$0xff] %v784
      %801 = vst [vmem:[%s253 + $0x58] sm:$0xff] %v785
      %802 = vst [vmem:[%s253 + $0x60] sm:$0xff] %v786
      %803 = vst [vmem:[%s253 + $0x68] sm:$0xff] %v787
      %804 = vst [vmem:[%s253 + $0x70] sm:$0xff] %v788
      %805 = vst [vmem:[%s253 + $0x78] sm:$0xff] %v789
      %p806 = scmp.lt.s32.totalorder %s20, 1
      %s807 = scalar_select %p806, %s20, 1
      %p808 = scmp.lt.s32.totalorder %s21, 0
      %s809 = scalar_select %p808, %s21, 0
      %s810 = smul.addr %s807, 16
      %s811 = sadd.s32 %s809, %s810
      %s812 = smul.addr %s811, 4
      %s813 = scalar_lea.vmem %s2, %s812
      %p814 = scmp.lt.s32.totalorder %s20, 1
      %s815 = scalar_select %p814, %s20, 1
      %s816 = smul.addr %s815, 16
      %s817 = smul.addr %s816, 8
      %s818 = scalar_lea.vmem %s3, %s817
      %p819 = scmp.lt.s32.totalorder %s20, 1
      %s820 = scalar_select %p819, %s20, 1
      %s821 = smul.addr %s820, 16
      %s822 = smul.addr %s821, 8
      %s823 = scalar_lea.vmem %s4, %s822
      // Predicated region
      $region33: #{down_forward.2} parent=27 // pred_check
        %p824 = pneg %p97
      $region34: #{down_forward.2} parent=27 // pred_check_branch
        %826 = sbr.rel (%p824) target = $region36
      $region35: #{down_forward.2} parent=27 // pred_region
        _
      $region36: #{down_forward.2} parent=27 // pred_fallthru
        _
      // Predicated region
      $region37: #{down_forward.2} parent=27 // pred_check
        %p827 = pneg %p123
      $region38: #{down_forward.2} parent=27 // pred_check_branch
        %829 = sbr.rel (%p827) target = $region40
      $region39: #{down_forward.2} parent=27 // pred_region
        _
      $region40: #{down_forward.2} parent=27 // pred_fallthru
        _
      // Predicated region
      $region41: #{down_forward.2} parent=27 // pred_check
        %p830 = pneg %p149
      $region42: #{down_forward.2} parent=27 // pred_check_branch
        %832 = sbr.rel (%p830) target = $region44
      $region43: #{down_forward.2} parent=27 // pred_region
        _
      $region44: #{down_forward.2} parent=27 // pred_fallthru
        _
    $region28: #{down_forward.2} parent=5 // pred_fallthru
      _
    %p833 = scmp.le.s32.totalorder 2, %s11
    // Predicated region
    $region45: #{down_forward.2} parent=5 // pred_check
      %p834 = pneg %p833
    $region46: #{down_forward.2} parent=5 // pred_check_branch
      %836 = sbr.rel (%p834) target = $region48
    $region47: #{down_forward.2} parent=5 // pred_region
      %s837 = ssub.s32 %s11, 2
      // Predicated region
      $region49: #{down_forward.2} parent=47 // pred_check
        %p838 = pneg %p103
      $region50: #{down_forward.2} parent=47 // pred_check_branch
        %840 = sbr.rel (%p838) target = $region52
      $region51: #{down_forward.2} parent=47 // pred_region
        %p841 = scmp.lt.s32.totalorder %s22, 1
        %s842 = scalar_select %p841, %s22, 1
        %p843 = scmp.lt.s32.totalorder %s23, 0
        %s844 = scalar_select %p843, %s23, 0
        %s845 = smul.addr %s842, 16
        %s846 = sadd.s32 %s844, %s845
        %s847 = smul.addr %s846, 4
        %s848 = scalar_lea.vmem %s2, %s847
      $region52: #{down_forward.2} parent=47 // pred_fallthru
        _
      // Predicated region
      $region53: #{down_forward.2} parent=47 // pred_check
        %p849 = pneg %p129
      $region54: #{down_forward.2} parent=47 // pred_check_branch
        %851 = sbr.rel (%p849) target = $region56
      $region55: #{down_forward.2} parent=47 // pred_region
        %p852 = scmp.lt.s32.totalorder %s22, 1
        %s853 = scalar_select %p852, %s22, 1
        %s854 = smul.addr %s853, 16
        %s855 = smul.addr %s854, 8
        %s856 = scalar_lea.vmem %s3, %s855
      $region56: #{down_forward.2} parent=47 // pred_fallthru
        _
      // Predicated region
      $region57: #{down_forward.2} parent=47 // pred_check
        %p857 = pneg %p155
      $region58: #{down_forward.2} parent=47 // pred_check_branch
        %859 = sbr.rel (%p857) target = $region60
      $region59: #{down_forward.2} parent=47 // pred_region
        %p860 = scmp.lt.s32.totalorder %s22, 1
        %s861 = scalar_select %p860, %s22, 1
        %s862 = smul.addr %s861, 16
        %s863 = smul.addr %s862, 8
        %s864 = scalar_lea.vmem %s4, %s863
      $region60: #{down_forward.2} parent=47 // pred_fallthru
        _
    $region48: #{down_forward.2} parent=5 // pred_fallthru
      _
  $region6: #{down_forward.2} parent=0 // loop_footer
    %s15 = sadd.s32 1, %s11
  $region7: #{down_forward.2} parent=0 // loop_footer_branch
    %10 = sbr.rel target = $region3
  $region8: #{down_forward.2} parent=0 // loop_exit
    _

</llo_original>
